<compile_context>
chip_gen: v6e
topology: v6e:2x2x1
jax: 0.10.0
libtpu: 0.0.40
codegen_flags: <defaults>
</compile_context>

<pallas_src>
import math
import functools

import jax
import jax.numpy as jnp
from jax.experimental import pallas as pl
from jax.experimental.pallas import tpu as pltpu


# ---------------------------------------------------------------------------
# Kernel
# ---------------------------------------------------------------------------
def _timestep_mlp_kernel(t_ref, freqs_ref, w1c_ref, w1s_ref, b1_ref,
                         w2_ref, w2_scale_ref, b2_ref, o_ref,
                         *, mxu_dtype, dequant_w2):
    # t:        [tb, 1]   f32   timesteps (B tile)
    # freqs:    [1, half] f32   static frequency table (precomputed in wrapper)
    # w1c/w1s:  [half, H] f32   first linear, cos / sin halves of the weight
    # b1:       [1, H]    f32
    # w2:       [H, tn]   storage dtype (f32 / bf16 / int8 / fp8)
    # w2_scale: [1, tn]   f32   per-output-column dequant scale (quant paths)
    # b2:       [1, tn]   f32
    # o:        [tb, tn]  f32
    args = t_ref[...] * freqs_ref[...]                         # [tb, half] f32
    cos_p = jnp.cos(args)
    sin_p = jnp.sin(args)

    # First GEMM + SiLU in f32: tiny (M=tb, K=2*half), fully hidden under the
    # W2 tile DMA.  cat([cos, sin]) @ W1 == cos @ W1_cos + sin @ W1_sin.
    h = (jnp.dot(cos_p, w1c_ref[...], preferred_element_type=jnp.float32)
         + jnp.dot(sin_p, w1s_ref[...], preferred_element_type=jnp.float32))
    h = h + b1_ref[...]                                        # [tb, H] f32
    h = h * jax.nn.sigmoid(h)                                  # SiLU (EUP)
    h = h.astype(mxu_dtype)

    # Second GEMM: W2 column tile streamed from HBM (the dominant traffic).
    w2_tile = w2_ref[...].astype(mxu_dtype)
    acc = jnp.dot(h, w2_tile, preferred_element_type=jnp.float32)   # [tb, tn]
    if dequant_w2:
        acc = acc * w2_scale_ref[...]        # fold per-column scale into epilogue
    o_ref[...] = (acc + b2_ref[...]).astype(o_ref.dtype)


# ---------------------------------------------------------------------------
# Tiling heuristics
# ---------------------------------------------------------------------------
def _pick_block_n(hidden, w2_itemsize, vmem_budget_bytes=40 << 20):
    """Largest W2 column tile that (a) divides H, (b) keeps >= 4 (else >= 2)
    grid steps so both v7x TensorCores get a pipelined stream, and (c) fits a
    conservative VMEM budget when double-buffered (safe on v5e/v6e/v7x)."""
    if hidden % 128 != 0:
        return hidden                       # non-aligned H: single full tile
    candidates = (2048, 1024, 512, 384, 256, 128)

    def ok(tn, min_steps):
        return (tn <= hidden and hidden % tn == 0
                and hidden // tn >= min_steps
                and 2 * hidden * tn * w2_itemsize <= vmem_budget_bytes)

    for min_steps in (4, 2):
        for tn in candidates:
            if ok(tn, min_steps):
                return tn
    return hidden


def _pick_block_b(batch):
    # Tile B only when it is large and 128-aligned; for the usual tiny batch
    # the per-tile first-GEMM recompute is fully hidden under the W2 DMA.
    if batch >= 256 and batch % 128 == 0:
        return 128
    return batch


# ---------------------------------------------------------------------------
# Forward wrapper
# ---------------------------------------------------------------------------
def timestep_embedding_forward(t, w1, b1, w2, b2, *, freq_embedding_size,
                               max_period=10000, w2_format="bf16",
                               block_n=None):
    """TimestepEmbedding forward.

    t : [B] timesteps
    w1: [freq_embedding_size, H]   (in, out) layout == PyTorch weight.T
    b1: [H]
    w2: [H, H]                     (in, out) layout
    b2: [H]
    w2_format: "f32" | "bf16" | "int8" | "fp8_e4m3"
        Storage dtype of the streamed W2 (this kernel is HBM-bound on W2).
        int8/fp8 use per-output-column scales folded into the f32 epilogue.
    Returns [B, H] float32.
    """
    B = t.shape[0]
    F = freq_embedding_size
    H = w1.shape[1]
    half = F // 2
    assert half >= 1, "freq_embedding_size must be >= 2"

    # --- W2 storage format --------------------------------------------------
    ones_scale = jnp.ones((1, H), jnp.float32)
    if w2_format == "f32":
        w2_k, w2_scale, dequant_w2, mxu_dtype = (
            w2.astype(jnp.float32), ones_scale, False, jnp.float32)
    elif w2_format == "bf16":
        w2_k, w2_scale, dequant_w2, mxu_dtype = (
            w2.astype(jnp.bfloat16), ones_scale, False, jnp.bfloat16)
    elif w2_format == "int8":
        amax = jnp.maximum(jnp.max(jnp.abs(w2), axis=0, keepdims=True), 1e-30)
        scale = (amax / 127.0).astype(jnp.float32)
        w2_k = jnp.clip(jnp.round(w2 / scale), -127, 127).astype(jnp.int8)
        w2_scale, dequant_w2, mxu_dtype = scale, True, jnp.bfloat16
    elif w2_format == "fp8_e4m3":
        amax = jnp.maximum(jnp.max(jnp.abs(w2), axis=0, keepdims=True), 1e-30)
        scale = (amax / 448.0).astype(jnp.float32)
        w2_k = jnp.clip(w2 / scale, -448.0, 448.0).astype(jnp.float8_e4m3fn)
        w2_scale, dequant_w2, mxu_dtype = scale, True, jnp.bfloat16
    else:
        raise ValueError(f"unknown w2_format: {w2_format}")
    w2_itemsize = jnp.dtype(w2_k.dtype).itemsize

    # --- tiling ---------------------------------------------------------------
    tn = _pick_block_n(H, w2_itemsize) if block_n is None else block_n
    assert H % tn == 0 and (tn % 128 == 0 or tn == H), \
        f"block_n={tn} must divide H={H} and be a multiple of 128 (or == H)"
    tb = _pick_block_b(B)
    grid_n = H // tn
    grid_b = B // tb

    # --- operand preparation (static freq table hoisted out of the kernel) ---
    freqs = jnp.exp((-math.log(max_period) / half)
                    * jnp.arange(half, dtype=jnp.float32)).reshape(1, half)
    t2d = t.astype(jnp.float32).reshape(B, 1)
    w1f = w1.astype(jnp.float32)
    w1c = w1f[:half, :]                    # cos half
    w1s = w1f[half:2 * half, :]            # sin half (odd-F zero-pad row dropped)
    b1_2d = b1.astype(jnp.float32).reshape(1, H)
    b2_2d = b2.astype(jnp.float32).reshape(1, H)

    kernel = functools.partial(_timestep_mlp_kernel, mxu_dtype=mxu_dtype,
                               dequant_w2=dequant_w2)

    cost = pl.CostEstimate(
        flops=2 * B * (2 * half) * H * grid_n + 2 * B * H * H,
        # cos/sin and the SiLU sigmoid are recomputed once per W2 column tile.
        transcendentals=(2 * B * half + B * H) * grid_n,
        bytes_accessed=(t2d.size + freqs.size + w1c.size + w1s.size
                        + b1_2d.size + b2_2d.size + w2_scale.size + B * H) * 4
                       + w2_k.size * w2_itemsize,
    )

    # --- VMEM sizing ----------------------------------------------------------
    resident_bytes = (tb + half + 2 * half * H + H) * 4         # t, freqs, W1, b1
    tile_bytes = H * tn * w2_itemsize + 2 * tn * 4              # W2 tile + scale + b2
    out_bytes = tb * tn * 4
    live_bytes = tb * (2 * half + 3 * H) * 4                    # cos/sin/h temporaries
    vmem_need = 2 * resident_bytes + 2 * tile_bytes + 2 * out_bytes + live_bytes
    vmem_limit = int(min(max(2 * vmem_need, 32 << 20), 64 << 20))

    compiler_params = pltpu.CompilerParams(
        dimension_semantics=("parallel", "parallel"),
        vmem_limit_bytes=vmem_limit)

    out_shape = jax.ShapeDtypeStruct((B, H), jnp.float32)

    def call(single_buffer_resident):
        if single_buffer_resident:
            # Grid-invariant operands: fetched once; Buffered(1) skips the dead
            # second pipeline buffer (VMEM headroom for bigger W2 tiles).
            def resident(shape):
                return pl.BlockSpec(shape, lambda n, b: (0, 0),
                                    pipeline_mode=pl.Buffered(1))
        else:
            def resident(shape):
                return pl.BlockSpec(shape, lambda n, b: (0, 0))

        in_specs = [
            pl.BlockSpec((tb, 1), lambda n, b: (b, 0)),        # t (B tile)
            resident((1, half)),                               # freqs
            resident((half, H)),                               # W1 cos half
            resident((half, H)),                               # W1 sin half
            resident((1, H)),                                  # b1
            pl.BlockSpec((H, tn), lambda n, b: (0, n)),        # W2 column tile (pipelined)
            pl.BlockSpec((1, tn), lambda n, b: (0, n)),        # per-column dequant scale
            pl.BlockSpec((1, tn), lambda n, b: (0, n)),        # b2 tile
        ]
        out_specs = pl.BlockSpec((tb, tn), lambda n, b: (b, n))  # lane-dense output

        return pl.pallas_call(
            kernel,
            out_shape=out_shape,
            grid=(grid_n, grid_b),   # n outer: W2 tile is not re-fetched across B tiles
            in_specs=in_specs,
            out_specs=out_specs,
            compiler_params=compiler_params,
            cost_estimate=cost,
        )(t2d, freqs, w1c, w1s, b1_2d, w2_k, w2_scale, b2_2d)

    try:
        return call(single_buffer_resident=True)
    except Exception:
        # pipeline_mode=pl.Buffered(1) not supported by this jax version /
        # backend; fall back to default double buffering (only VMEM headroom).
        return call(single_buffer_resident=False)


# ---------------------------------------------------------------------------
# Pure-JAX reference (replica of the PyTorch forward) for verification
# ---------------------------------------------------------------------------
def reference_forward(t, w1, b1, w2, b2, *, freq_embedding_size, max_period=10000):
    dim = freq_embedding_size
    half = dim // 2
    freqs = jnp.exp(-math.log(max_period)
                    * jnp.arange(half, dtype=jnp.float32) / half)
    args = t.astype(jnp.float32)[:, None] * freqs[None]
    emb = jnp.concatenate([jnp.cos(args), jnp.sin(args)], axis=-1)
    if dim % 2:
        emb = jnp.concatenate([emb, jnp.zeros_like(emb[:, :1])], axis=-1)
    h = emb @ w1 + b1
    h = h * jax.nn.sigmoid(h)
    return h @ w2 + b2


if __name__ == "__main__":
    # Small but 128-aligned shapes: half=128, two W2 column tiles (grid_n=2),
    # so the pipelined/lane-dense paths are actually exercised.
    batch = 8
    freq_embedding_size = 256
    hidden_size = 256

    key = jax.random.PRNGKey(0)
    k_t, k_w1, k_b1, k_w2, k_b2 = jax.random.split(key, 5)

    t = jax.random.uniform(k_t, (batch,), jnp.float32, minval=0.0, maxval=1000.0)
    # Parameters ([in, out] layout), normal init std=0.02 like the module.
    w1 = 0.02 * jax.random.normal(k_w1, (freq_embedding_size, hidden_size), jnp.float32)
    b1 = 0.02 * jax.random.normal(k_b1, (hidden_size,), jnp.float32)
    w2 = 0.02 * jax.random.normal(k_w2, (hidden_size, hidden_size), jnp.float32)
    b2 = 0.02 * jax.random.normal(k_b2, (hidden_size,), jnp.float32)

    ref = jax.block_until_ready(
        reference_forward(t, w1, b1, w2, b2,
                          freq_embedding_size=freq_embedding_size))

    # 1) f32 W2 path (numerically tight).
    out_f32 = jax.block_until_ready(
        timestep_embedding_forward(t, w1, b1, w2, b2,
                                   freq_embedding_size=freq_embedding_size,
                                   w2_format="f32"))
    assert out_f32.shape == (batch, hidden_size)
    assert jnp.allclose(out_f32, ref, atol=2e-3, rtol=2e-3), \
        f"f32 max abs err {float(jnp.max(jnp.abs(out_f32 - ref)))}"

    # 2) Default production path: bf16-streamed W2, f32 first GEMM + accumulation.
    out_bf16 = jax.block_until_ready(
        timestep_embedding_forward(t, w1, b1, w2, b2,
                                   freq_embedding_size=freq_embedding_size))
    assert out_bf16.shape == (batch, hidden_size)
    assert jnp.allclose(out_bf16, ref, atol=2e-2, rtol=2e-2), \
        f"bf16 max abs err {float(jnp.max(jnp.abs(out_bf16 - ref)))}"

    # 3) int8 W2 with per-column scales folded into the f32 epilogue
    #    (the ~2x HBM-bytes lever for v5e/v6e; fp8_e4m3 is the v7x analogue).
    out_i8 = jax.block_until_ready(
        timestep_embedding_forward(t, w1, b1, w2, b2,
                                   freq_embedding_size=freq_embedding_size,
                                   w2_format="int8"))
    assert jnp.allclose(out_i8, ref, atol=2e-2, rtol=5e-2), \
        f"int8 max abs err {float(jnp.max(jnp.abs(out_i8 - ref)))}"

    # 4) Odd, non-128-aligned frequency size (half=16, zero-pad row dropped):
    #    exercises the pre-split cos/sin GEMM path with small K.
    F2, H2 = 33, 128
    w1s_ = 0.02 * jax.random.normal(k_w1, (F2, H2), jnp.float32)
    b1s_ = 0.02 * jax.random.normal(k_b1, (H2,), jnp.float32)
    w2s_ = 0.02 * jax.random.normal(k_w2, (H2, H2), jnp.float32)
    b2s_ = 0.02 * jax.random.normal(k_b2, (H2,), jnp.float32)
    ref_s = jax.block_until_ready(
        reference_forward(t, w1s_, b1s_, w2s_, b2s_, freq_embedding_size=F2))
    out_s = jax.block_until_ready(
        timestep_embedding_forward(t, w1s_, b1s_, w2s_, b2s_,
                                   freq_embedding_size=F2, w2_format="f32"))
    assert jnp.allclose(out_s, ref_s, atol=2e-3, rtol=2e-3), \
        f"odd-F path max abs err {float(jnp.max(jnp.abs(out_s - ref_s)))}"

    print("KERNEL_OK")
</pallas_src>

<mosaic_0001>
module attributes {stable_mosaic.version = 11 : i64} {
  func.func @_timestep_mlp_kernel(%arg0: i32, %arg1: i32, %arg2: memref<8x1xf32, #tpu.memory_space<vmem>>, %arg3: memref<1x128xf32, #tpu.memory_space<vmem>>, %arg4: memref<128x256xf32, #tpu.memory_space<vmem>>, %arg5: memref<128x256xf32, #tpu.memory_space<vmem>>, %arg6: memref<1x256xf32, #tpu.memory_space<vmem>>, %arg7: memref<256x128xf32, #tpu.memory_space<vmem>>, %arg8: memref<1x128xf32, #tpu.memory_space<vmem>>, %arg9: memref<1x128xf32, #tpu.memory_space<vmem>>, %arg10: memref<8x128xf32, #tpu.memory_space<vmem>>) attributes {dimension_semantics = [#tpu.dimension_semantics<parallel>, #tpu.dimension_semantics<parallel>], iteration_bounds = array<i64: 2, 1>, scalar_prefetch = 0 : i64, scratch_operands = 0 : i64, tpu.core_type = #tpu.core_type<tc>, window_params = [{transform_indices = @transform_0, window_bounds = array<i64: 8, 1>}, {pipeline_mode = #tpu.pipeline_mode<synchronous>, transform_indices = @transform_1, window_bounds = array<i64: 1, 128>}, {pipeline_mode = #tpu.pipeline_mode<synchronous>, transform_indices = @transform_2, window_bounds = array<i64: 128, 256>}, {pipeline_mode = #tpu.pipeline_mode<synchronous>, transform_indices = @transform_3, window_bounds = array<i64: 128, 256>}, {pipeline_mode = #tpu.pipeline_mode<synchronous>, transform_indices = @transform_4, window_bounds = array<i64: 1, 256>}, {transform_indices = @transform_5, window_bounds = array<i64: 256, 128>}, {transform_indices = @transform_6, window_bounds = array<i64: 1, 128>}, {transform_indices = @transform_7, window_bounds = array<i64: 1, 128>}, {transform_indices = @transform_8, window_bounds = array<i64: 8, 128>}]} {
    %c0 = arith.constant 0 : index
    %c0_0 = arith.constant 0 : index
    %0 = vector.load %arg2[%c0, %c0_0] : memref<8x1xf32, #tpu.memory_space<vmem>>, vector<8x1xf32>
    %c0_1 = arith.constant 0 : index
    %c0_2 = arith.constant 0 : index
    %1 = vector.load %arg3[%c0_1, %c0_2] : memref<1x128xf32, #tpu.memory_space<vmem>>, vector<1x128xf32>
    %2 = vector.broadcast %0 : vector<8x1xf32> to vector<8x128xf32>
    %3 = vector.broadcast %1 : vector<1x128xf32> to vector<8x128xf32>
    %4 = arith.mulf %2, %3 : vector<8x128xf32>
    %5 = math.cos %4 : vector<8x128xf32>
    %6 = math.sin %4 : vector<8x128xf32>
    %c0_3 = arith.constant 0 : index
    %c0_4 = arith.constant 0 : index
    %7 = vector.load %arg4[%c0_3, %c0_4] : memref<128x256xf32, #tpu.memory_space<vmem>>, vector<128x256xf32>
    %cst = arith.constant dense<0.000000e+00> : vector<8x256xf32>
    %8 = tpu.matmul %5, %7, %cst {dimension_numbers = #tpu.dot_dimension_numbers<[1], [0], [0], [1], [0, 0, 1, 1], [], []>} : vector<8x128xf32>, vector<128x256xf32>, vector<8x256xf32> -> vector<8x256xf32>
    %c0_5 = arith.constant 0 : index
    %c0_6 = arith.constant 0 : index
    %9 = vector.load %arg5[%c0_5, %c0_6] : memref<128x256xf32, #tpu.memory_space<vmem>>, vector<128x256xf32>
    %cst_7 = arith.constant dense<0.000000e+00> : vector<8x256xf32>
    %10 = tpu.matmul %6, %9, %cst_7 {dimension_numbers = #tpu.dot_dimension_numbers<[1], [0], [0], [1], [0, 0, 1, 1], [], []>} : vector<8x128xf32>, vector<128x256xf32>, vector<8x256xf32> -> vector<8x256xf32>
    %11 = arith.addf %8, %10 : vector<8x256xf32>
    %c0_8 = arith.constant 0 : index
    %c0_9 = arith.constant 0 : index
    %12 = vector.load %arg6[%c0_8, %c0_9] : memref<1x256xf32, #tpu.memory_space<vmem>>, vector<1x256xf32>
    %13 = vector.broadcast %12 : vector<1x256xf32> to vector<8x256xf32>
    %14 = arith.addf %11, %13 : vector<8x256xf32>
    %15 = arith.negf %14 : vector<8x256xf32>
    %16 = math.exp %15 : vector<8x256xf32>
    %cst_10 = arith.constant 1.000000e+00 : f32
    %17 = vector.broadcast %cst_10 : f32 to vector<8x256xf32>
    %18 = arith.addf %17, %16 : vector<8x256xf32>
    %19 = arith.divf %17, %18 : vector<8x256xf32>
    %20 = arith.mulf %14, %19 : vector<8x256xf32>
    %c0_11 = arith.constant 0 : index
    %c0_12 = arith.constant 0 : index
    %21 = vector.load %arg7[%c0_11, %c0_12] : memref<256x128xf32, #tpu.memory_space<vmem>>, vector<256x128xf32>
    %cst_13 = arith.constant dense<0.000000e+00> : vector<8x128xf32>
    %22 = tpu.matmul %20, %21, %cst_13 {dimension_numbers = #tpu.dot_dimension_numbers<[1], [0], [0], [1], [0, 0, 1, 1], [], []>} : vector<8x256xf32>, vector<256x128xf32>, vector<8x128xf32> -> vector<8x128xf32>
    %c0_14 = arith.constant 0 : index
    %c0_15 = arith.constant 0 : index
    %23 = vector.load %arg9[%c0_14, %c0_15] : memref<1x128xf32, #tpu.memory_space<vmem>>, vector<1x128xf32>
    %24 = vector.broadcast %23 : vector<1x128xf32> to vector<8x128xf32>
    %25 = arith.addf %22, %24 : vector<8x128xf32>
    %c0_16 = arith.constant 0 : index
    %c0_17 = arith.constant 0 : index
    %26 = vector.load %arg10[%c0_16, %c0_17] : memref<8x128xf32, #tpu.memory_space<vmem>>, vector<8x128xf32>
    tpu.vector_store %arg10[%c0_16, %c0_17], %25 {strides = array<i32>} : memref<8x128xf32, #tpu.memory_space<vmem>>, vector<8x128xf32>,
    return
  }
  func.func @transform_0(%arg0: i32, %arg1: i32) -> (i32, i32) {
    %c0_i32 = arith.constant 0 : i32
    %c0_i32_0 = arith.constant 0 : i32
    return %arg1, %c0_i32 : i32, i32
  }
  func.func @transform_1(%arg0: i32, %arg1: i32) -> (i32, i32) {
    %c0_i32 = arith.constant 0 : i32
    %c0_i32_0 = arith.constant 0 : i32
    %c0_i32_1 = arith.constant 0 : i32
    return %c0_i32, %c0_i32_0 : i32, i32
  }
  func.func @transform_2(%arg0: i32, %arg1: i32) -> (i32, i32) {
    %c0_i32 = arith.constant 0 : i32
    %c0_i32_0 = arith.constant 0 : i32
    %c0_i32_1 = arith.constant 0 : i32
    return %c0_i32, %c0_i32_0 : i32, i32
  }
  func.func @transform_3(%arg0: i32, %arg1: i32) -> (i32, i32) {
    %c0_i32 = arith.constant 0 : i32
    %c0_i32_0 = arith.constant 0 : i32
    %c0_i32_1 = arith.constant 0 : i32
    return %c0_i32, %c0_i32_0 : i32, i32
  }
  func.func @transform_4(%arg0: i32, %arg1: i32) -> (i32, i32) {
    %c0_i32 = arith.constant 0 : i32
    %c0_i32_0 = arith.constant 0 : i32
    %c0_i32_1 = arith.constant 0 : i32
    return %c0_i32, %c0_i32_0 : i32, i32
  }
  func.func @transform_5(%arg0: i32, %arg1: i32) -> (i32, i32) {
    %c0_i32 = arith.constant 0 : i32
    %c0_i32_0 = arith.constant 0 : i32
    return %c0_i32, %arg0 : i32, i32
  }
  func.func @transform_6(%arg0: i32, %arg1: i32) -> (i32, i32) {
    %c0_i32 = arith.constant 0 : i32
    %c0_i32_0 = arith.constant 0 : i32
    return %c0_i32, %arg0 : i32, i32
  }
  func.func @transform_7(%arg0: i32, %arg1: i32) -> (i32, i32) {
    %c0_i32 = arith.constant 0 : i32
    %c0_i32_0 = arith.constant 0 : i32
    return %c0_i32, %arg0 : i32, i32
  }
  func.func @transform_8(%arg0: i32, %arg1: i32) -> (i32, i32) {
    %c0_i32 = arith.constant 0 : i32
    return %arg1, %arg0 : i32, i32
  }
}

module attributes {stable_mosaic.version = 11 : i64} {
  func.func @_timestep_mlp_kernel(%arg0: i32, %arg1: i32, %arg2: memref<8x1xf32, #tpu.memory_space<vmem>>, %arg3: memref<1x128xf32, #tpu.memory_space<vmem>>, %arg4: memref<128x256xf32, #tpu.memory_space<vmem>>, %arg5: memref<128x256xf32, #tpu.memory_space<vmem>>, %arg6: memref<1x256xf32, #tpu.memory_space<vmem>>, %arg7: memref<256x128xf32, #tpu.memory_space<vmem>>, %arg8: memref<1x128xf32, #tpu.memory_space<vmem>>, %arg9: memref<1x128xf32, #tpu.memory_space<vmem>>, %arg10: memref<8x128xf32, #tpu.memory_space<vmem>>) attributes {dimension_semantics = [#tpu.dimension_semantics<parallel>, #tpu.dimension_semantics<parallel>], iteration_bounds = array<i64: 2, 1>, scalar_prefetch = 0 : i64, scratch_operands = 0 : i64, tpu.core_type = #tpu.core_type<tc>, window_params = [{transform_indices = @transform_0, window_bounds = array<i64: 8, 1>}, {pipeline_mode = #tpu.pipeline_mode<synchronous>, transform_indices = @transform_1, window_bounds = array<i64: 1, 128>}, {pipeline_mode = #tpu.pipeline_mode<synchronous>, transform_indices = @transform_2, window_bounds = array<i64: 128, 256>}, {pipeline_mode = #tpu.pipeline_mode<synchronous>, transform_indices = @transform_3, window_bounds = array<i64: 128, 256>}, {pipeline_mode = #tpu.pipeline_mode<synchronous>, transform_indices = @transform_4, window_bounds = array<i64: 1, 256>}, {transform_indices = @transform_5, window_bounds = array<i64: 256, 128>}, {transform_indices = @transform_6, window_bounds = array<i64: 1, 128>}, {transform_indices = @transform_7, window_bounds = array<i64: 1, 128>}, {transform_indices = @transform_8, window_bounds = array<i64: 8, 128>}]} {
    %c0 = arith.constant 0 : index
    %c0_0 = arith.constant 0 : index
    %0 = vector.load %arg2[%c0, %c0_0] : memref<8x1xf32, #tpu.memory_space<vmem>>, vector<8x1xf32>
    %c0_1 = arith.constant 0 : index
    %c0_2 = arith.constant 0 : index
    %1 = vector.load %arg3[%c0_1, %c0_2] : memref<1x128xf32, #tpu.memory_space<vmem>>, vector<1x128xf32>
    %2 = vector.broadcast %0 : vector<8x1xf32> to vector<8x128xf32>
    %3 = vector.broadcast %1 : vector<1x128xf32> to vector<8x128xf32>
    %4 = arith.mulf %2, %3 : vector<8x128xf32>
    %5 = math.cos %4 : vector<8x128xf32>
    %6 = math.sin %4 : vector<8x128xf32>
    %c0_3 = arith.constant 0 : index
    %c0_4 = arith.constant 0 : index
    %7 = vector.load %arg4[%c0_3, %c0_4] : memref<128x256xf32, #tpu.memory_space<vmem>>, vector<128x256xf32>
    %cst = arith.constant dense<0.000000e+00> : vector<8x256xf32>
    %8 = tpu.matmul %5, %7, %cst {dimension_numbers = #tpu.dot_dimension_numbers<[1], [0], [0], [1], [0, 0, 1, 1], [], []>} : vector<8x128xf32>, vector<128x256xf32>, vector<8x256xf32> -> vector<8x256xf32>
    %c0_5 = arith.constant 0 : index
    %c0_6 = arith.constant 0 : index
    %9 = vector.load %arg5[%c0_5, %c0_6] : memref<128x256xf32, #tpu.memory_space<vmem>>, vector<128x256xf32>
    %cst_7 = arith.constant dense<0.000000e+00> : vector<8x256xf32>
    %10 = tpu.matmul %6, %9, %cst_7 {dimension_numbers = #tpu.dot_dimension_numbers<[1], [0], [0], [1], [0, 0, 1, 1], [], []>} : vector<8x128xf32>, vector<128x256xf32>, vector<8x256xf32> -> vector<8x256xf32>
    %11 = arith.addf %8, %10 : vector<8x256xf32>
    %c0_8 = arith.constant 0 : index
    %c0_9 = arith.constant 0 : index
    %12 = vector.load %arg6[%c0_8, %c0_9] : memref<1x256xf32, #tpu.memory_space<vmem>>, vector<1x256xf32>
    %13 = vector.broadcast %12 : vector<1x256xf32> to vector<8x256xf32>
    %14 = arith.addf %11, %13 : vector<8x256xf32>
    %15 = arith.negf %14 : vector<8x256xf32>
    %16 = math.exp %15 : vector<8x256xf32>
    %cst_10 = arith.constant 1.000000e+00 : f32
    %17 = vector.broadcast %cst_10 : f32 to vector<8x256xf32>
    %18 = arith.addf %17, %16 : vector<8x256xf32>
    %19 = arith.divf %17, %18 : vector<8x256xf32>
    %20 = arith.mulf %14, %19 : vector<8x256xf32>
    %c0_11 = arith.constant 0 : index
    %c0_12 = arith.constant 0 : index
    %21 = vector.load %arg7[%c0_11, %c0_12] : memref<256x128xf32, #tpu.memory_space<vmem>>, vector<256x128xf32>
    %cst_13 = arith.constant dense<0.000000e+00> : vector<8x128xf32>
    %22 = tpu.matmul %20, %21, %cst_13 {dimension_numbers = #tpu.dot_dimension_numbers<[1], [0], [0], [1], [0, 0, 1, 1], [], []>} : vector<8x256xf32>, vector<256x128xf32>, vector<8x128xf32> -> vector<8x128xf32>
    %c0_14 = arith.constant 0 : index
    %c0_15 = arith.constant 0 : index
    %23 = vector.load %arg9[%c0_14, %c0_15] : memref<1x128xf32, #tpu.memory_space<vmem>>, vector<1x128xf32>
    %24 = vector.broadcast %23 : vector<1x128xf32> to vector<8x128xf32>
    %25 = arith.addf %22, %24 : vector<8x128xf32>
    %c0_16 = arith.constant 0 : index
    %c0_17 = arith.constant 0 : index
    %26 = vector.load %arg10[%c0_16, %c0_17] : memref<8x128xf32, #tpu.memory_space<vmem>>, vector<8x128xf32>
    tpu.vector_store %arg10[%c0_16, %c0_17], %25 {strides = array<i32>} : memref<8x128xf32, #tpu.memory_space<vmem>>, vector<8x128xf32>,
    return
  }
  func.func @transform_0(%arg0: i32, %arg1: i32) -> (i32, i32) {
    %c0_i32 = arith.constant 0 : i32
    %c0_i32_0 = arith.constant 0 : i32
    return %arg1, %c0_i32 : i32, i32
  }
  func.func @transform_1(%arg0: i32, %arg1: i32) -> (i32, i32) {
    %c0_i32 = arith.constant 0 : i32
    %c0_i32_0 = arith.constant 0 : i32
    %c0_i32_1 = arith.constant 0 : i32
    return %c0_i32, %c0_i32_0 : i32, i32
  }
  func.func @transform_2(%arg0: i32, %arg1: i32) -> (i32, i32) {
    %c0_i32 = arith.constant 0 : i32
    %c0_i32_0 = arith.constant 0 : i32
    %c0_i32_1 = arith.constant 0 : i32
    return %c0_i32, %c0_i32_0 : i32, i32
  }
  func.func @transform_3(%arg0: i32, %arg1: i32) -> (i32, i32) {
    %c0_i32 = arith.constant 0 : i32
    %c0_i32_0 = arith.constant 0 : i32
    %c0_i32_1 = arith.constant 0 : i32
    return %c0_i32, %c0_i32_0 : i32, i32
  }
  func.func @transform_4(%arg0: i32, %arg1: i32) -> (i32, i32) {
    %c0_i32 = arith.constant 0 : i32
    %c0_i32_0 = arith.constant 0 : i32
    %c0_i32_1 = arith.constant 0 : i32
    return %c0_i32, %c0_i32_0 : i32, i32
  }
  func.func @transform_5(%arg0: i32, %arg1: i32) -> (i32, i32) {
    %c0_i32 = arith.constant 0 : i32
    %c0_i32_0 = arith.constant 0 : i32
    return %c0_i32, %arg0 : i32, i32
  }
  func.func @transform_6(%arg0: i32, %arg1: i32) -> (i32, i32) {
    %c0_i32 = arith.constant 0 : i32
    %c0_i32_0 = arith.constant 0 : i32
    return %c0_i32, %arg0 : i32, i32
  }
  func.func @transform_7(%arg0: i32, %arg1: i32) -> (i32, i32) {
    %c0_i32 = arith.constant 0 : i32
    %c0_i32_0 = arith.constant 0 : i32
    return %c0_i32, %arg0 : i32, i32
  }
  func.func @transform_8(%arg0: i32, %arg1: i32) -> (i32, i32) {
    %c0_i32 = arith.constant 0 : i32
    return %arg1, %arg0 : i32, i32
  }
}

</mosaic_0001>

<llo_original>
// kernel: tpu_custom_call.1
$region0: #{tpu_custom_call.1}
  #allocation0 [shape = 'u32[]', space=smem, size = 0x4, offset = 0x4, fixed_abs, tag = 'smem constant byte address 0x4 - core index']
  #allocation1 [shape = 'u32[144,128]{1,0:T(1,128)}', space=vmem, size = 0x12000, scoped, tag = 'internal scratch']
  %s0 = inlined_call_operand.vmem [shape: f32[8,1], index: 0, kind: input, shape index: {}]
  %s1 = inlined_call_operand.vmem [shape: f32[1,128], index: 1, kind: input, shape index: {}]
  %s2 = inlined_call_operand.hbm [shape: f32[128,256], index: 2, kind: input, shape index: {}]
  %s3 = inlined_call_operand.hbm [shape: f32[128,256], index: 3, kind: input, shape index: {}]
  %s4 = inlined_call_operand.vmem [shape: f32[1,256], index: 4, kind: input, shape index: {}]
  %s5 = inlined_call_operand.hbm [shape: f32[256,256], index: 5, kind: input, shape index: {}]
  %s6 = inlined_call_operand.vmem [shape: f32[1,256], index: 6, kind: input, shape index: {}]
  %s7 = inlined_call_operand.vmem [shape: f32[1,256], index: 7, kind: input, shape index: {}]
  %s8 = inlined_call_operand.hbm [shape: f32[8,256], index: 8, kind: output, shape index: {}]
  %s9 = sld [smem:[#allocation0]]
  $region77: #{tpu_custom_call.1} parent=0
    _
  %s11 = ssub.s32 1, %s9
  %s12 = scalar_select 0, %s11, %s9
  $region1: #{tpu_custom_call.1} parent=0
    #allocation2 [shape = 'u8[131072]{0}', space=vmem, size = 0x20000, scoped, tag = 'input window, operand 2, single buffered']
    #allocation3 [shape = 's32[2]{0}', space=sflag, size = 0x8, scoped, tag = 'scoped memory for tpu_custom_call.1']
    #allocation4 [shape = 's32[2]{0}', space=sflag, size = 0x8, scoped, tag = 'scoped memory for tpu_custom_call.1']
    #allocation5 [shape = 'u8[131072]{0}', space=vmem, size = 0x20000, scoped, tag = 'input window, operand 3, single buffered']
    #allocation6 [shape = 's32[1]{0}', space=sflag, size = 0x4, scoped, tag = 'scoped memory for tpu_custom_call.1']
    #allocation7 [shape = 'u8[262144]{0}', space=vmem, size = 0x40000, scoped, tag = 'input window, operand 5']
    #allocation8 [shape = 'u8[8192]{0}', space=vmem, size = 0x2000, scoped, tag = 'output window, operand 0']
    %13 = vsyncpa [#allocation3], 0
    %14 = vsyncpa [#allocation6], 0
    %15 = vsyncpa [#allocation4], 0
    %s16 = scalar_lea.sflag [#allocation4], 1
    %17 = vsyncpa %s16, 0
    loop: start=0, step=1, limit=4
    $region2: #{tpu_custom_call.1} parent=1 // loop_pre_header
      _
    $region3: #{tpu_custom_call.1} parent=1 // loop_header
      %s19 = sphi 0, %s23
      %p20 = scmp.ge.s32.totalorder %s19, 4
      %s26 = sphi 0, %s38
      %s27 = sphi 0, %s34
      %s28 = sphi 0, %s26
      %s29 = sphi 0, %s27
      %s30 = sphi 0, %s28
      %s31 = sphi 0, %s29
      %s41 = sphi 0, %s43
      %s44 = sphi 0, %s41
      %s45 = sphi 0, %s44
      %s61 = sphi 0, %s45
      %s65 = sphi 0, %s65
      %s67 = sphi 0, %s65
      %s68 = sphi 0, %s67
      %s82 = sphi 0, %s68
      %s86 = sphi 0, %s86
      %s88 = sphi 0, %s86
      %s89 = sphi 0, %s88
      %s103 = sphi 0, %s89
      %s107 = sphi 0, %s107
      %s109 = sphi 0, %s107
      %s110 = sphi 0, %s109
      %s124 = sphi 0, %s110
      %s128 = sphi 0, %s128
      %s130 = sphi 0, %s128
      %s131 = sphi 0, %s130
      %s145 = sphi 0, %s131
      %s151 = sphi 0, %s153
      %s154 = sphi 0, %s151
      %s155 = sphi 0, %s154
      %s171 = sphi 0, %s155
      %s177 = sphi 0, %s179
      %s180 = sphi 0, %s177
      %s181 = sphi 0, %s180
      %s197 = sphi 0, %s181
      %s203 = sphi 0, %s205
      %s206 = sphi 0, %s203
      %s207 = sphi 0, %s206
      %s223 = sphi 0, %s207
      %s231 = sphi 0, %s233
      %s234 = sphi 0, %s231
      %s235 = sphi 0, %s234
      %s251 = sphi 0, %s235
    $region4: #{tpu_custom_call.1} parent=1 // loop_header_branch
      %22 = sbr.rel (%p20) target = $region8
    $region5: #{tpu_custom_call.1} parent=1 // loop_body
      %s24 = ssub.s32 %s19, 1
      %s25 = ssub.s32 %s19, 2
      %s32 = sadd.s32 1, %s27
      %p33 = scmp.ge.s32.totalorder %s32, 1
      %s34 = scalar_select %p33, 0, %s32
      %s35 = sadd.s32 1, %s26
      %s36 = scalar_select %p33, %s35, %s26
      %p37 = scmp.ge.s32.totalorder %s36, 2
      %s38 = scalar_select %p37, 0, %s36
      %s39 = ssub.s32 %s27, %s34
      %p40 = scmp.eq.s32.totalorder %s39, 0
      %s42 = sadd.s32 %s41, 1
      %s43 = scalar_select %p40, %s41, %s42
      %p46 = pneg %p40
      %p47 = scmp.eq.s32.totalorder %s19, 1
      %p48 = por %p46, %p47
      %p49 = scmp.ne.s32.totalorder %s41, %s44
      %p50 = scmp.eq.s32.totalorder %s19, 0
      %p51 = por %p49, %p50
      %p52 = scmp.ne.s32.totalorder %s41, %s44
      %p53 = scmp.eq.s32.totalorder %s24, 1
      %p54 = por %p52, %p53
      %p55 = scmp.ne.s32.totalorder %s44, %s45
      %p56 = scmp.eq.s32.totalorder %s24, 0
      %p57 = por %p55, %p56
      %p58 = scmp.ne.s32.totalorder %s44, %s45
      %p59 = scmp.eq.s32.totalorder %s25, 1
      %p60 = por %p58, %p59
      %p62 = scmp.ne.s32.totalorder %s45, %s61
      %p63 = scmp.eq.s32.totalorder %s25, 0
      %p64 = por %p62, %p63
      %s66 = sadd.s32 %s65, 1
      %p69 = scmp.eq.s32.totalorder %s19, 1
      %p70 = scmp.ne.s32.totalorder %s65, %s67
      %p71 = scmp.eq.s32.totalorder %s19, 0
      %p72 = por %p70, %p71
      %p73 = scmp.ne.s32.totalorder %s65, %s67
      %p74 = scmp.eq.s32.totalorder %s24, 1
      %p75 = por %p73, %p74
      %p76 = scmp.ne.s32.totalorder %s67, %s68
      %p77 = scmp.eq.s32.totalorder %s24, 0
      %p78 = por %p76, %p77
      %p79 = scmp.ne.s32.totalorder %s67, %s68
      %p80 = scmp.eq.s32.totalorder %s25, 1
      %p81 = por %p79, %p80
      %p83 = scmp.ne.s32.totalorder %s68, %s82
      %p84 = scmp.eq.s32.totalorder %s25, 0
      %p85 = por %p83, %p84
      %s87 = sadd.s32 %s86, 1
      %p90 = scmp.eq.s32.totalorder %s19, 1
      %p91 = scmp.ne.s32.totalorder %s86, %s88
      %p92 = scmp.eq.s32.totalorder %s19, 0
      %p93 = por %p91, %p92
      %p94 = scmp.ne.s32.totalorder %s86, %s88
      %p95 = scmp.eq.s32.totalorder %s24, 1
      %p96 = por %p94, %p95
      %p97 = scmp.ne.s32.totalorder %s88, %s89
      %p98 = scmp.eq.s32.totalorder %s24, 0
      %p99 = por %p97, %p98
      %p100 = scmp.ne.s32.totalorder %s88, %s89
      %p101 = scmp.eq.s32.totalorder %s25, 1
      %p102 = por %p100, %p101
      %p104 = scmp.ne.s32.totalorder %s89, %s103
      %p105 = scmp.eq.s32.totalorder %s25, 0
      %p106 = por %p104, %p105
      %s108 = sadd.s32 %s107, 1
      %p111 = scmp.eq.s32.totalorder %s19, 1
      %p112 = scmp.ne.s32.totalorder %s107, %s109
      %p113 = scmp.eq.s32.totalorder %s19, 0
      %p114 = por %p112, %p113
      %p115 = scmp.ne.s32.totalorder %s107, %s109
      %p116 = scmp.eq.s32.totalorder %s24, 1
      %p117 = por %p115, %p116
      %p118 = scmp.ne.s32.totalorder %s109, %s110
      %p119 = scmp.eq.s32.totalorder %s24, 0
      %p120 = por %p118, %p119
      %p121 = scmp.ne.s32.totalorder %s109, %s110
      %p122 = scmp.eq.s32.totalorder %s25, 1
      %p123 = por %p121, %p122
      %p125 = scmp.ne.s32.totalorder %s110, %s124
      %p126 = scmp.eq.s32.totalorder %s25, 0
      %p127 = por %p125, %p126
      %s129 = sadd.s32 %s128, 1
      %p132 = scmp.eq.s32.totalorder %s19, 1
      %p133 = scmp.ne.s32.totalorder %s128, %s130
      %p134 = scmp.eq.s32.totalorder %s19, 0
      %p135 = por %p133, %p134
      %p136 = scmp.ne.s32.totalorder %s128, %s130
      %p137 = scmp.eq.s32.totalorder %s24, 1
      %p138 = por %p136, %p137
      %p139 = scmp.ne.s32.totalorder %s130, %s131
      %p140 = scmp.eq.s32.totalorder %s24, 0
      %p141 = por %p139, %p140
      %p142 = scmp.ne.s32.totalorder %s130, %s131
      %p143 = scmp.eq.s32.totalorder %s25, 1
      %p144 = por %p142, %p143
      %p146 = scmp.ne.s32.totalorder %s131, %s145
      %p147 = scmp.eq.s32.totalorder %s25, 0
      %p148 = por %p146, %p147
      %s149 = ssub.s32 %s26, %s38
      %p150 = scmp.eq.s32.totalorder %s149, 0
      %s152 = sadd.s32 %s151, 1
      %s153 = scalar_select %p150, %s151, %s152
      %p156 = pneg %p150
      %p157 = scmp.eq.s32.totalorder %s19, 1
      %p158 = por %p156, %p157
      %p159 = scmp.ne.s32.totalorder %s151, %s154
      %p160 = scmp.eq.s32.totalorder %s19, 0
      %p161 = por %p159, %p160
      %p162 = scmp.ne.s32.totalorder %s151, %s154
      %p163 = scmp.eq.s32.totalorder %s24, 1
      %p164 = por %p162, %p163
      %p165 = scmp.ne.s32.totalorder %s154, %s155
      %p166 = scmp.eq.s32.totalorder %s24, 0
      %p167 = por %p165, %p166
      %p168 = scmp.ne.s32.totalorder %s154, %s155
      %p169 = scmp.eq.s32.totalorder %s25, 1
      %p170 = por %p168, %p169
      %p172 = scmp.ne.s32.totalorder %s155, %s171
      %p173 = scmp.eq.s32.totalorder %s25, 0
      %p174 = por %p172, %p173
      %s175 = ssub.s32 %s26, %s38
      %p176 = scmp.eq.s32.totalorder %s175, 0
      %s178 = sadd.s32 %s177, 1
      %s179 = scalar_select %p176, %s177, %s178
      %p182 = pneg %p176
      %p183 = scmp.eq.s32.totalorder %s19, 1
      %p184 = por %p182, %p183
      %p185 = scmp.ne.s32.totalorder %s177, %s180
      %p186 = scmp.eq.s32.totalorder %s19, 0
      %p187 = por %p185, %p186
      %p188 = scmp.ne.s32.totalorder %s177, %s180
      %p189 = scmp.eq.s32.totalorder %s24, 1
      %p190 = por %p188, %p189
      %p191 = scmp.ne.s32.totalorder %s180, %s181
      %p192 = scmp.eq.s32.totalorder %s24, 0
      %p193 = por %p191, %p192
      %p194 = scmp.ne.s32.totalorder %s180, %s181
      %p195 = scmp.eq.s32.totalorder %s25, 1
      %p196 = por %p194, %p195
      %p198 = scmp.ne.s32.totalorder %s181, %s197
      %p199 = scmp.eq.s32.totalorder %s25, 0
      %p200 = por %p198, %p199
      %s201 = ssub.s32 %s26, %s38
      %p202 = scmp.eq.s32.totalorder %s201, 0
      %s204 = sadd.s32 %s203, 1
      %s205 = scalar_select %p202, %s203, %s204
      %p208 = pneg %p202
      %p209 = scmp.eq.s32.totalorder %s19, 1
      %p210 = por %p208, %p209
      %p211 = scmp.ne.s32.totalorder %s203, %s206
      %p212 = scmp.eq.s32.totalorder %s19, 0
      %p213 = por %p211, %p212
      %p214 = scmp.ne.s32.totalorder %s203, %s206
      %p215 = scmp.eq.s32.totalorder %s24, 1
      %p216 = por %p214, %p215
      %p217 = scmp.ne.s32.totalorder %s206, %s207
      %p218 = scmp.eq.s32.totalorder %s24, 0
      %p219 = por %p217, %p218
      %p220 = scmp.ne.s32.totalorder %s206, %s207
      %p221 = scmp.eq.s32.totalorder %s25, 1
      %p222 = por %p220, %p221
      %p224 = scmp.ne.s32.totalorder %s207, %s223
      %p225 = scmp.eq.s32.totalorder %s25, 0
      %p226 = por %p224, %p225
      %s227 = ssub.s32 %s27, %s34
      %s228 = ssub.s32 %s26, %s38
      %s229 = sor.u32 %s227, %s228
      %p230 = scmp.eq.s32.totalorder %s229, 0
      %s232 = sadd.s32 %s231, 1
      %s233 = scalar_select %p230, %s231, %s232
      %p236 = pneg %p230
      %p237 = scmp.eq.s32.totalorder %s19, 1
      %p238 = por %p236, %p237
      %p239 = scmp.ne.s32.totalorder %s231, %s234
      %p240 = scmp.eq.s32.totalorder %s19, 0
      %p241 = por %p239, %p240
      %p242 = scmp.ne.s32.totalorder %s231, %s234
      %p243 = scmp.eq.s32.totalorder %s24, 1
      %p244 = por %p242, %p243
      %p245 = scmp.ne.s32.totalorder %s234, %s235
      %p246 = scmp.eq.s32.totalorder %s24, 0
      %p247 = por %p245, %p246
      %p248 = scmp.ne.s32.totalorder %s234, %s235
      %p249 = scmp.eq.s32.totalorder %s25, 1
      %p250 = por %p248, %p249
      %p252 = scmp.ne.s32.totalorder %s235, %s251
      %p253 = scmp.eq.s32.totalorder %s25, 0
      %p254 = por %p252, %p253
      %p255 = scmp.le.s32.totalorder 1, %s19
      %p256 = scmp.lt.s32.totalorder %s19, 3
      %p257 = pnand %p255, %p256
      %p258 = pneg %p257
      // Predicated region
      $region9: #{tpu_custom_call.1} parent=5 // pred_check
        _
      $region10: #{tpu_custom_call.1} parent=5 // pred_check_branch
        %260 = sbr.rel (%p257) target = $region12
      $region11: #{tpu_custom_call.1} parent=5 // pred_region
        %s261 = ssub.s32 %s19, 1
        // Predicated region
        $region13: #{tpu_custom_call.1} parent=11 // pred_check
          %p262 = pneg %p57
        $region14: #{tpu_custom_call.1} parent=11 // pred_check_branch
          %264 = sbr.rel (%p262) target = $region16
        $region15: #{tpu_custom_call.1} parent=11 // pred_region
          %p265 = scmp.lt.s32.totalorder %s29, 0
          %s266 = scalar_select %p265, %s29, 0
          %s267 = smul.addr %s266, 8
          %s268 = scalar_lea.vmem %s0, %s267
        $region16: #{tpu_custom_call.1} parent=11 // pred_fallthru
          _
        // Predicated region
        $region17: #{tpu_custom_call.1} parent=11 // pred_check
          %p269 = pneg %p78
        $region18: #{tpu_custom_call.1} parent=11 // pred_check_branch
          %271 = sbr.rel (%p269) target = $region20
        $region19: #{tpu_custom_call.1} parent=11 // pred_region
          _
        $region20: #{tpu_custom_call.1} parent=11 // pred_fallthru
          _
        // Predicated region
        $region21: #{tpu_custom_call.1} parent=11 // pred_check
          %p272 = pneg %p99
        $region22: #{tpu_custom_call.1} parent=11 // pred_check_branch
          %274 = sbr.rel (%p272) target = $region24
        $region23: #{tpu_custom_call.1} parent=11 // pred_region
          %s276 = ssub.s32 4096, 4096
          %277 = vsyncadd [#allocation3], %s276
          %s278 = sshll.u32 [#allocation2], 4
          %s279 = int_to_ptr.vmem [resolvable:$true] %s278
          %284 = dma.hbm_to_vmem [thread:$0]  %s2, 4096, %s279, [#allocation3], 256, 256, 16
        $region24: #{tpu_custom_call.1} parent=11 // pred_fallthru
          _
        // Predicated region
        $region25: #{tpu_custom_call.1} parent=11 // pred_check
          %p285 = pneg %p120
        $region26: #{tpu_custom_call.1} parent=11 // pred_check_branch
          %287 = sbr.rel (%p285) target = $region28
        $region27: #{tpu_custom_call.1} parent=11 // pred_region
          %s289 = ssub.s32 4096, 4096
          %290 = vsyncadd [#allocation6], %s289
          %s291 = sshll.u32 [#allocation5], 4
          %s292 = int_to_ptr.vmem [resolvable:$true] %s291
          %297 = dma.hbm_to_vmem [thread:$0]  %s3, 4096, %s292, [#allocation6], 256, 256, 16
        $region28: #{tpu_custom_call.1} parent=11 // pred_fallthru
          _
        // Predicated region
        $region29: #{tpu_custom_call.1} parent=11 // pred_check
          %p298 = pneg %p141
        $region30: #{tpu_custom_call.1} parent=11 // pred_check_branch
          %300 = sbr.rel (%p298) target = $region32
        $region31: #{tpu_custom_call.1} parent=11 // pred_region
          _
        $region32: #{tpu_custom_call.1} parent=11 // pred_fallthru
          _
      $region12: #{tpu_custom_call.1} parent=5 // pred_fallthru
        _
      %p301 = scmp.lt.s32.totalorder %s19, 2
      // Predicated region
      $region33: #{tpu_custom_call.1} parent=5 // pred_check
        %p302 = pneg %p301
      $region34: #{tpu_custom_call.1} parent=5 // pred_check_branch
        %304 = sbr.rel (%p302) target = $region36
      $region35: #{tpu_custom_call.1} parent=5 // pred_region
        // Predicated region
        $region37: #{tpu_custom_call.1} parent=35 // pred_check
          %p305 = pneg %p161
        $region38: #{tpu_custom_call.1} parent=35 // pred_check_branch
          %307 = sbr.rel (%p305) target = $region40
        $region39: #{tpu_custom_call.1} parent=35 // pred_region
          %s308 = sand.u32 %s19, 1
          %s309 = scalar_lea.sflag [#allocation3], %s308
          %s310 = sand.u32 %s151, 1
          %s311 = smul.addr %s310, 256
          %s312 = scalar_lea.vmem [#allocation7], %s311
          %s314 = ssub.s32 4096, 4096
          %315 = vsyncadd %s309, %s314
          %s316 = smul.addr %s26, 128
          %s317 = scalar_lea.hbm %s5, %s316
          %s318 = sshll.u32 %s312, 4
          %s319 = int_to_ptr.vmem [resolvable:$true] %s318
          %324 = dma.hbm_to_vmem [thread:$0]  %s317, 4096, %s319, %s309, 256, 128, 8
        $region40: #{tpu_custom_call.1} parent=35 // pred_fallthru
          _
        // Predicated region
        $region41: #{tpu_custom_call.1} parent=35 // pred_check
          %p325 = pneg %p187
        $region42: #{tpu_custom_call.1} parent=35 // pred_check_branch
          %327 = sbr.rel (%p325) target = $region44
        $region43: #{tpu_custom_call.1} parent=35 // pred_region
          %p328 = scmp.lt.s32.totalorder %s26, 1
          %s329 = scalar_select %p328, %s26, 1
          %s330 = scalar_lea.vmem %s6, %s329
        $region44: #{tpu_custom_call.1} parent=35 // pred_fallthru
          _
        // Predicated region
        $region45: #{tpu_custom_call.1} parent=35 // pred_check
          %p331 = pneg %p213
        $region46: #{tpu_custom_call.1} parent=35 // pred_check_branch
          %333 = sbr.rel (%p331) target = $region48
        $region47: #{tpu_custom_call.1} parent=35 // pred_region
          %p334 = scmp.lt.s32.totalorder %s26, 1
          %s335 = scalar_select %p334, %s26, 1
          %s336 = scalar_lea.vmem %s7, %s335
        $region48: #{tpu_custom_call.1} parent=35 // pred_fallthru
          _
      $region36: #{tpu_custom_call.1} parent=5 // pred_fallthru
        _
      %p337 = scmp.le.s32.totalorder 1, %s19
      %p338 = scmp.lt.s32.totalorder %s19, 3
      %p339 = pnand %p337, %p338
      %p340 = pneg %p339
      // Predicated region
      $region49: #{tpu_custom_call.1} parent=5 // pred_check
        _
      $region50: #{tpu_custom_call.1} parent=5 // pred_check_branch
        %342 = sbr.rel (%p339) target = $region52
      $region51: #{tpu_custom_call.1} parent=5 // pred_region
        %s343 = ssub.s32 %s19, 1
        // Predicated region
        $region53: #{tpu_custom_call.1} parent=51 // pred_check
          %p344 = pneg %p99
        $region54: #{tpu_custom_call.1} parent=51 // pred_check_branch
          %346 = sbr.rel (%p344) target = $region56
        $region55: #{tpu_custom_call.1} parent=51 // pred_region
          %347 = dma.done [#allocation3], 4096
        $region56: #{tpu_custom_call.1} parent=51 // pred_fallthru
          _
        // Predicated region
        $region57: #{tpu_custom_call.1} parent=51 // pred_check
          %p348 = pneg %p120
        $region58: #{tpu_custom_call.1} parent=51 // pred_check_branch
          %350 = sbr.rel (%p348) target = $region60
        $region59: #{tpu_custom_call.1} parent=51 // pred_region
          %351 = dma.done [#allocation6], 4096
        $region60: #{tpu_custom_call.1} parent=51 // pred_fallthru
          _
        %s352 = sand.u32 %s24, 1
        %s353 = scalar_lea.sflag [#allocation3], %s352
        %s354 = sand.u32 %s154, 1
        %s355 = smul.addr %s354, 256
        %s356 = scalar_lea.vmem [#allocation7], %s355
        // Predicated region
        $region61: #{tpu_custom_call.1} parent=51 // pred_check
          %p357 = pneg %p167
        $region62: #{tpu_custom_call.1} parent=51 // pred_check_branch
          %359 = sbr.rel (%p357) target = $region64
        $region63: #{tpu_custom_call.1} parent=51 // pred_region
          %360 = dma.done %s353, 4096
        $region64: #{tpu_custom_call.1} parent=51 // pred_fallthru
          _
        %p361 = scmp.lt.s32.totalorder %s29, 0
        %s362 = scalar_select %p361, %s29, 0
        %s363 = smul.addr %s362, 8
        %s364 = scalar_lea.vmem %s0, %s363
        %p365 = pneg %p57
        %p366 = pneg %p54
        %p367 = pneg %p78
        %p368 = pneg %p75
        %p369 = pneg %p99
        %p370 = pneg %p96
        %p371 = pneg %p120
        %p372 = pneg %p117
        %p373 = pneg %p141
        %p374 = pneg %p138
        %s375 = sand.u32 %s24, 1
        %s376 = scalar_lea.sflag [#allocation3], %s375
        %s377 = sand.u32 %s154, 1
        %s378 = smul.addr %s377, 256
        %s379 = scalar_lea.vmem [#allocation7], %s378
        %p380 = pneg %p167
        %p381 = pneg %p164
        %p382 = scmp.lt.s32.totalorder %s28, 1
        %s383 = scalar_select %p382, %s28, 1
        %s384 = scalar_lea.vmem %s6, %s383
        %p385 = pneg %p193
        %p386 = pneg %p190
        %p387 = scmp.lt.s32.totalorder %s28, 1
        %s388 = scalar_select %p387, %s28, 1
        %s389 = scalar_lea.vmem %s7, %s388
        %p390 = pneg %p219
        %p391 = pneg %p216
        %p392 = pneg %p247
        %p393 = pneg %p244
        %s394 = sand.u32 %s234, 1
        %s395 = scalar_lea.sflag [#allocation4], %s394
        %s396 = sand.u32 %s234, 1
        %s397 = smul.addr %s396, 8
        %s398 = scalar_lea.vmem [#allocation8], %s397
        %p399 = scmp.lt.s32.totalorder %s29, 0
        %s400 = scalar_select %p399, %s29, 0
        %s401 = smul.addr %s400, 8
        %s402 = scalar_lea.vmem %s0, %s401
        %p403 = scmp.lt.s32.totalorder %s28, 1
        %s404 = scalar_select %p403, %s28, 1
        %s405 = scalar_lea.vmem %s6, %s404
        %p406 = scmp.lt.s32.totalorder %s28, 1
        %s407 = scalar_select %p406, %s28, 1
        %s408 = scalar_lea.vmem %s7, %s407
        %v409 = vld [vmem:[%s402] sm:$0xff]
        %v410 = vld [vmem:[%s1] sm:$0x1]
        %412 = vset.pattern.permute.xlu0 0
        %413 = vperm.xlu0 %412, %v409
        %v414 = vpop.permute.xlu0 %413
        %v417 = vlaneseq
        %v418 = vshrl.u32 %v417, 7
        %v419 = vsub.s32 0, %v418
        %v420 = vrot.slane %v410, %v419
        %v422 = vmul.f32 %v414, %v420
        %v423 = vand.u32 2147483647, %v422
        %vm424 = vcmp.le.f32.partialorder %v423, 0.7853982
        %vm425 = vcmp.lt.s32.totalorder %v422, 0
        %v426 = vand.u32 %v422, 2139095040
        %v427 = vshrl.u32 %v426, 23
        %v428 = vsub.s32 %v427, 127
        %v429 = vand.u32 2147483647, %v422
        %v430 = vand.u32 %v429, 8388607
        %v431 = vor.u32 %v430, 8388608
        %v432 = vsub.s32 0, %v431
        %v433 = vadd.s32 %v428, 1
        %vm434 = vcmp.gt.s32.totalorder %v433, 0
        %v435 = vsel %vm434, %v433, 0
        %v436 = vshrl.u32 %v435, 5
        %v437 = vand.u32 %v435, 31
        %v438 = vsub.s32 32, %v437
        %v439 = vshrl.u32 683565275, %v438
        %v440 = vshll.u32 683565275, %v437
        %v441 = vshrl.u32 2475754826, %v438
        %v442 = vor.u32 %v440, %v441
        %v443 = vshll.u32 2475754826, %v437
        %v444 = vshrl.u32 2131351028, %v438
        %v445 = vor.u32 %v443, %v444
        %v446 = vshll.u32 2131351028, %v437
        %v447 = vshrl.u32 2102212464, %v438
        %v448 = vor.u32 %v446, %v447
        %v449 = vshll.u32 2102212464, %v437
        %v450 = vshrl.u32 920167782, %v438
        %v451 = vor.u32 %v449, %v450
        %v452 = vshll.u32 920167782, %v437
        %v453 = vshrl.u32 1326507024, %v438
        %v454 = vor.u32 %v452, %v453
        %vm455 = vcmp.lt.s32.totalorder %v436, 1
        %vm456 = vcmp.lt.s32.totalorder %v436, 2
        %vm457 = vcmp.lt.s32.totalorder %v436, 3
        %vm458 = vcmp.lt.s32.totalorder %v436, 4
        %v459 = vsel %vm455, %v439, %v442
        %v460 = vsel %vm458, %v448, 2102212464
        %v461 = vsel %vm457, %v445, %v460
        %v462 = vsel %vm456, %v459, %v461
        %v463 = vsel %vm455, %v442, %v445
        %v464 = vsel %vm458, %v451, 920167782
        %v465 = vsel %vm457, %v448, %v464
        %v466 = vsel %vm456, %v463, %v465
        %v467 = vsel %vm455, %v445, %v448
        %v468 = vsel %vm458, %v454, 1326507024
        %v469 = vsel %vm457, %v451, %v468
        %v470 = vsel %vm456, %v467, %v469
        %v471 = vshll.u32 %v431, 8
        %v472 = vmul.u32.u64.compose %v471, %v470
        %v473 = vextract.low.u32 %v472
        %v474 = vextract.high.u32 %v472
        %v475 = vmul.u32.u64.compose %v471, %v466
        %v476 = vextract.low.u32 %v475
        %v477 = vextract.high.u32 %v475
        %v478 = vmul.u32 %v471, %v462
        %v479 = vadd.s32 %v474, %v476
        %vm480 = vc.u32 %v474, %v476
        %v481 = vadd.s32 %v477, 1
        %v482 = vsel %vm480, %v481, %v477
        %v483 = vadd.s32 %v478, %v482
        %v484 = vadd.s32 %v483, 536870912
        %v485 = vshrl.u32 %v484, 30
        %v486 = vshll.u32 %v485, 30
        %v487 = vsub.s32 %v483, %v486
        %vm488 = vcmp.lt.s32.totalorder %v487, 0
        %v489 = vsub.s32 0, %v487
        %v490 = vsel %vm488, %v489, %v487
        %v491 = vclz %v490
        %v492 = vsub.s32 %v491, 2
        %vm493 = vcmp.gt.s32.totalorder 0, %v492
        %v494 = vsel %vm493, 0, %v492
        %v495 = vsub.s32 32, %v494
        %v496 = vshll.u32 %v487, %v494
        %v497 = vshrl.u32 %v479, %v495
        %v498 = vor.u32 %v496, %v497
        %v499 = vsub.s32 4294967266, %v494
        %v500 = vadd.s32 %v499, 127
        %v501 = vshll.u32 %v500, 23
        %v502 = vor.u32 4788187, %v501
        %v503 = vand.u32 2147483647, %v502
        %v505 = vcvt.s32.f32 %v498
        %v506 = vmul.f32 %v505, %v503
        %v507 = vxor.u32 %v506, 2147483648
        %v508 = vsel %vm425, %v507, %v506
        %v509 = vsub.s32 4, %v485
        %v510 = vsel %vm425, %v509, %v485
        %v511 = vsel %vm424, %v422, %v508
        %v512 = vsel %vm424, 0, %v510
        %v513 = vcosq.f32.pop %v511
        %v514 = vsinq.f32.pop %v511
        %vm515 = vweird.f32 %v422
        %v516 = vand.u32 %v512, 3
        %vm517 = vcmp.lt.s32.totalorder %v516, 2
        %vm518 = vcmp.eq.s32.totalorder %v516, 0
        %v519 = vxor.u32 %v514, 2147483648
        %v520 = vsel %vm518, %v513, %v519
        %vm521 = vcmp.eq.s32.totalorder %v516, 2
        %v522 = vxor.u32 %v513, 2147483648
        %v523 = vsel %vm521, %v522, %v514
        %v524 = vsel %vm517, %v520, %v523
        %v525 = vsel %vm515, nan, %v524
        %v526 = vand.u32 2147483647, %v422
        %vm527 = vcmp.le.f32.partialorder %v526, 0.7853982
        %vm528 = vcmp.lt.s32.totalorder %v422, 0
        %v529 = vand.u32 %v422, 2139095040
        %v530 = vshrl.u32 %v529, 23
        %v531 = vsub.s32 %v530, 127
        %v532 = vand.u32 2147483647, %v422
        %v533 = vand.u32 %v532, 8388607
        %v534 = vor.u32 %v533, 8388608
        %v535 = vsub.s32 0, %v534
        %v536 = vadd.s32 %v531, 1
        %vm537 = vcmp.gt.s32.totalorder %v536, 0
        %v538 = vsel %vm537, %v536, 0
        %v539 = vshrl.u32 %v538, 5
        %v540 = vand.u32 %v538, 31
        %v541 = vsub.s32 32, %v540
        %v542 = vshrl.u32 683565275, %v541
        %v543 = vshll.u32 683565275, %v540
        %v544 = vshrl.u32 2475754826, %v541
        %v545 = vor.u32 %v543, %v544
        %v546 = vshll.u32 2475754826, %v540
        %v547 = vshrl.u32 2131351028, %v541
        %v548 = vor.u32 %v546, %v547
        %v549 = vshll.u32 2131351028, %v540
        %v550 = vshrl.u32 2102212464, %v541
        %v551 = vor.u32 %v549, %v550
        %v552 = vshll.u32 2102212464, %v540
        %v553 = vshrl.u32 920167782, %v541
        %v554 = vor.u32 %v552, %v553
        %v555 = vshll.u32 920167782, %v540
        %v556 = vshrl.u32 1326507024, %v541
        %v557 = vor.u32 %v555, %v556
        %vm558 = vcmp.lt.s32.totalorder %v539, 1
        %vm559 = vcmp.lt.s32.totalorder %v539, 2
        %vm560 = vcmp.lt.s32.totalorder %v539, 3
        %vm561 = vcmp.lt.s32.totalorder %v539, 4
        %v562 = vsel %vm558, %v542, %v545
        %v563 = vsel %vm561, %v551, 2102212464
        %v564 = vsel %vm560, %v548, %v563
        %v565 = vsel %vm559, %v562, %v564
        %v566 = vsel %vm558, %v545, %v548
        %v567 = vsel %vm561, %v554, 920167782
        %v568 = vsel %vm560, %v551, %v567
        %v569 = vsel %vm559, %v566, %v568
        %v570 = vsel %vm558, %v548, %v551
        %v571 = vsel %vm561, %v557, 1326507024
        %v572 = vsel %vm560, %v554, %v571
        %v573 = vsel %vm559, %v570, %v572
        %v574 = vshll.u32 %v534, 8
        %v575 = vmul.u32.u64.compose %v574, %v573
        %v576 = vextract.low.u32 %v575
        %v577 = vextract.high.u32 %v575
        %v578 = vmul.u32.u64.compose %v574, %v569
        %v579 = vextract.low.u32 %v578
        %v580 = vextract.high.u32 %v578
        %v581 = vmul.u32 %v574, %v565
        %v582 = vadd.s32 %v577, %v579
        %vm583 = vc.u32 %v577, %v579
        %v584 = vadd.s32 %v580, 1
        %v585 = vsel %vm583, %v584, %v580
        %v586 = vadd.s32 %v581, %v585
        %v587 = vadd.s32 %v586, 536870912
        %v588 = vshrl.u32 %v587, 30
        %v589 = vshll.u32 %v588, 30
        %v590 = vsub.s32 %v586, %v589
        %vm591 = vcmp.lt.s32.totalorder %v590, 0
        %v592 = vsub.s32 0, %v590
        %v593 = vsel %vm591, %v592, %v590
        %v594 = vclz %v593
        %v595 = vsub.s32 %v594, 2
        %vm596 = vcmp.gt.s32.totalorder 0, %v595
        %v597 = vsel %vm596, 0, %v595
        %v598 = vsub.s32 32, %v597
        %v599 = vshll.u32 %v590, %v597
        %v600 = vshrl.u32 %v582, %v598
        %v601 = vor.u32 %v599, %v600
        %v602 = vsub.s32 4294967266, %v597
        %v603 = vadd.s32 %v602, 127
        %v604 = vshll.u32 %v603, 23
        %v605 = vor.u32 4788187, %v604
        %v606 = vand.u32 2147483647, %v605
        %v608 = vcvt.s32.f32 %v601
        %v609 = vmul.f32 %v608, %v606
        %v610 = vxor.u32 %v609, 2147483648
        %v611 = vsel %vm528, %v610, %v609
        %v612 = vsub.s32 4, %v588
        %v613 = vsel %vm528, %v612, %v588
        %v614 = vsel %vm527, %v422, %v611
        %v615 = vsel %vm527, 0, %v613
        %v616 = vcosq.f32.pop %v614
        %v617 = vsinq.f32.pop %v614
        %vm618 = vweird.f32 %v422
        %v619 = vadd.s32 %v615, 3
        %v620 = vand.u32 %v619, 3
        %vm621 = vcmp.lt.s32.totalorder %v620, 2
        %vm622 = vcmp.eq.s32.totalorder %v620, 0
        %v623 = vxor.u32 %v617, 2147483648
        %v624 = vsel %vm622, %v616, %v623
        %vm625 = vcmp.eq.s32.totalorder %v620, 2
        %v626 = vxor.u32 %v616, 2147483648
        %v627 = vsel %vm625, %v626, %v617
        %v628 = vsel %vm621, %v624, %v627
        %v629 = vsel %vm618, nan, %v628
        %v630 = vld [vmem:[#allocation2] sm:$0xff]
        %v631 = vld [vmem:[#allocation2 + $0x8] sm:$0xff]
        %v632 = vld [vmem:[#allocation2 + $0x10] sm:$0xff]
        %v633 = vld [vmem:[#allocation2 + $0x18] sm:$0xff]
        %v634 = vld [vmem:[#allocation2 + $0x20] sm:$0xff]
        %v635 = vld [vmem:[#allocation2 + $0x28] sm:$0xff]
        %v636 = vld [vmem:[#allocation2 + $0x30] sm:$0xff]
        %v637 = vld [vmem:[#allocation2 + $0x38] sm:$0xff]
        %v638 = vld [vmem:[#allocation2 + $0x40] sm:$0xff]
        %v639 = vld [vmem:[#allocation2 + $0x48] sm:$0xff]
        %v640 = vld [vmem:[#allocation2 + $0x50] sm:$0xff]
        %v641 = vld [vmem:[#allocation2 + $0x58] sm:$0xff]
        %v642 = vld [vmem:[#allocation2 + $0x60] sm:$0xff]
        %v643 = vld [vmem:[#allocation2 + $0x68] sm:$0xff]
        %v644 = vld [vmem:[#allocation2 + $0x70] sm:$0xff]
        %v645 = vld [vmem:[#allocation2 + $0x78] sm:$0xff]
        %v646 = vld [vmem:[#allocation2 + $0x80] sm:$0xff]
        %v647 = vld [vmem:[#allocation2 + $0x88] sm:$0xff]
        %v648 = vld [vmem:[#allocation2 + $0x90] sm:$0xff]
        %v649 = vld [vmem:[#allocation2 + $0x98] sm:$0xff]
        %v650 = vld [vmem:[#allocation2 + $0xa0] sm:$0xff]
        %v651 = vld [vmem:[#allocation2 + $0xa8] sm:$0xff]
        %v652 = vld [vmem:[#allocation2 + $0xb0] sm:$0xff]
        %v653 = vld [vmem:[#allocation2 + $0xb8] sm:$0xff]
        %v654 = vld [vmem:[#allocation2 + $0xc0] sm:$0xff]
        %v655 = vld [vmem:[#allocation2 + $0xc8] sm:$0xff]
        %v656 = vld [vmem:[#allocation2 + $0xd0] sm:$0xff]
        %v657 = vld [vmem:[#allocation2 + $0xd8] sm:$0xff]
        %v658 = vld [vmem:[#allocation2 + $0xe0] sm:$0xff]
        %v659 = vld [vmem:[#allocation2 + $0xe8] sm:$0xff]
        %v660 = vld [vmem:[#allocation2 + $0xf0] sm:$0xff]
        %v661 = vld [vmem:[#allocation2 + $0xf8] sm:$0xff]
        %v662 = vld [vmem:[#allocation5] sm:$0xff]
        %v663 = vld [vmem:[#allocation5 + $0x8] sm:$0xff]
        %v664 = vld [vmem:[#allocation5 + $0x10] sm:$0xff]
        %v665 = vld [vmem:[#allocation5 + $0x18] sm:$0xff]
        %v666 = vld [vmem:[#allocation5 + $0x20] sm:$0xff]
        %v667 = vld [vmem:[#allocation5 + $0x28] sm:$0xff]
        %v668 = vld [vmem:[#allocation5 + $0x30] sm:$0xff]
        %v669 = vld [vmem:[#allocation5 + $0x38] sm:$0xff]
        %v670 = vld [vmem:[#allocation5 + $0x40] sm:$0xff]
        %v671 = vld [vmem:[#allocation5 + $0x48] sm:$0xff]
        %v672 = vld [vmem:[#allocation5 + $0x50] sm:$0xff]
        %v673 = vld [vmem:[#allocation5 + $0x58] sm:$0xff]
        %v674 = vld [vmem:[#allocation5 + $0x60] sm:$0xff]
        %v675 = vld [vmem:[#allocation5 + $0x68] sm:$0xff]
        %v676 = vld [vmem:[#allocation5 + $0x70] sm:$0xff]
        %v677 = vld [vmem:[#allocation5 + $0x78] sm:$0xff]
        %v678 = vld [vmem:[#allocation5 + $0x80] sm:$0xff]
        %v679 = vld [vmem:[#allocation5 + $0x88] sm:$0xff]
        %v680 = vld [vmem:[#allocation5 + $0x90] sm:$0xff]
        %v681 = vld [vmem:[#allocation5 + $0x98] sm:$0xff]
        %v682 = vld [vmem:[#allocation5 + $0xa0] sm:$0xff]
        %v683 = vld [vmem:[#allocation5 + $0xa8] sm:$0xff]
        %v684 = vld [vmem:[#allocation5 + $0xb0] sm:$0xff]
        %v685 = vld [vmem:[#allocation5 + $0xb8] sm:$0xff]
        %v686 = vld [vmem:[#allocation5 + $0xc0] sm:$0xff]
        %v687 = vld [vmem:[#allocation5 + $0xc8] sm:$0xff]
        %v688 = vld [vmem:[#allocation5 + $0xd0] sm:$0xff]
        %v689 = vld [vmem:[#allocation5 + $0xd8] sm:$0xff]
        %v690 = vld [vmem:[#allocation5 + $0xe0] sm:$0xff]
        %v691 = vld [vmem:[#allocation5 + $0xe8] sm:$0xff]
        %v692 = vld [vmem:[#allocation5 + $0xf0] sm:$0xff]
        %v693 = vld [vmem:[#allocation5 + $0xf8] sm:$0xff]
        %694 = vmatprep.subr.mxu0 %v693
        %695 = vmatpush1.msra.mxu0 %v692
        %696 = vmatprep.subr.mxu0 %v691
        %697 = vmatpush1.msra.mxu0 %v690
        %698 = vmatprep.subr.mxu0 %v689
        %699 = vmatpush1.msra.mxu0 %v688
        %700 = vmatprep.subr.mxu0 %v687
        %701 = vmatpush1.msra.mxu0 %v686
        %702 = vmatprep.subr.mxu0 %v685
        %703 = vmatpush1.msra.mxu0 %v684
        %704 = vmatprep.subr.mxu0 %v683
        %705 = vmatpush1.msra.mxu0 %v682
        %706 = vmatprep.subr.mxu0 %v681
        %707 = vmatpush1.msra.mxu0 %v680
        %708 = vmatprep.subr.mxu0 %v679
        %709 = vmatpush1.msra.mxu0 %v678
        %710 = vmatprep.subr.mxu0 %v677
        %711 = vmatpush1.msra.mxu0 %v676
        %712 = vmatprep.subr.mxu0 %v675
        %713 = vmatpush1.msra.mxu0 %v674
        %714 = vmatprep.subr.mxu0 %v673
        %715 = vmatpush1.msra.mxu0 %v672
        %716 = vmatprep.subr.mxu0 %v671
        %717 = vmatpush1.msra.mxu0 %v670
        %718 = vmatprep.subr.mxu0 %v669
        %719 = vmatpush1.msra.mxu0 %v668
        %720 = vmatprep.subr.mxu0 %v667
        %721 = vmatpush1.msra.mxu0 %v666
        %722 = vmatprep.subr.mxu0 %v665
        %723 = vmatpush1.msra.mxu0 %v664
        %724 = vmatprep.subr.mxu0 %v663
        %725 = vmatpush1.msra.mxu0 %v662
        %726 = vmatprep.subr.mxu0 0.0
        %727 = vmatpush2.msra.mxu0 0.0
        %728 = vmatprep.subr.mxu0 0.0
        %729 = vmatpush2.msra.mxu0 0.0
        %730 = vmatprep.subr.mxu0 0.0
        %731 = vmatpush2.msra.mxu0 0.0
        %732 = vmatprep.subr.mxu0 0.0
        %733 = vmatpush2.msra.mxu0 0.0
        %734 = vmatprep.subr.mxu0 0.0
        %735 = vmatpush2.msra.mxu0 0.0
        %736 = vmatprep.subr.mxu0 0.0
        %737 = vmatpush2.msra.mxu0 0.0
        %738 = vmatprep.subr.mxu0 0.0
        %739 = vmatpush2.msra.mxu0 0.0
        %740 = vmatprep.subr.mxu0 0.0
        %741 = vmatpush2.msra.mxu0 0.0
        %742 = vmatprep.subr.mxu0 0.0
        %743 = vmatpush2.msra.mxu0 0.0
        %744 = vmatprep.subr.mxu0 0.0
        %745 = vmatpush2.msra.mxu0 0.0
        %746 = vmatprep.subr.mxu0 0.0
        %747 = vmatpush2.msra.mxu0 0.0
        %748 = vmatprep.subr.mxu0 0.0
        %749 = vmatpush2.msra.mxu0 0.0
        %750 = vmatprep.subr.mxu0 0.0
        %751 = vmatpush2.msra.mxu0 0.0
        %752 = vmatprep.subr.mxu0 0.0
        %753 = vmatpush2.msra.mxu0 0.0
        %754 = vmatprep.subr.mxu0 0.0
        %755 = vmatpush2.msra.mxu0 0.0
        %756 = vmatprep.subr.mxu0 0.0
        %757 = vmatpush2.msra.mxu0 0.0
        %758 = vmatprep.mubr.f32.mxu0 0.0
        %759 = vmatmul.mubr.f32.gmra.mxu0 %v629
        %v760 = vpop.f32.mrf.mxu0
        %v761 = vadd.f32 0.0, %v760
        %v762 = vpop.f32.mrf.mxu0
        %v763 = vadd.f32 0.0, %v762
        %764 = vdwg.mxu0
        %765 = vmatprep.subr.mxu0 %v661
        %766 = vmatpush1.msra.mxu0 %v660
        %767 = vmatprep.subr.mxu0 %v659
        %768 = vmatpush1.msra.mxu0 %v658
        %769 = vmatprep.subr.mxu0 %v657
        %770 = vmatpush1.msra.mxu0 %v656
        %771 = vmatprep.subr.mxu0 %v655
        %772 = vmatpush1.msra.mxu0 %v654
        %773 = vmatprep.subr.mxu0 %v653
        %774 = vmatpush1.msra.mxu0 %v652
        %775 = vmatprep.subr.mxu0 %v651
        %776 = vmatpush1.msra.mxu0 %v650
        %777 = vmatprep.subr.mxu0 %v649
        %778 = vmatpush1.msra.mxu0 %v648
        %779 = vmatprep.subr.mxu0 %v647
        %780 = vmatpush1.msra.mxu0 %v646
        %781 = vmatprep.subr.mxu0 %v645
        %782 = vmatpush1.msra.mxu0 %v644
        %783 = vmatprep.subr.mxu0 %v643
        %784 = vmatpush1.msra.mxu0 %v642
        %785 = vmatprep.subr.mxu0 %v641
        %786 = vmatpush1.msra.mxu0 %v640
        %787 = vmatprep.subr.mxu0 %v639
        %788 = vmatpush1.msra.mxu0 %v638
        %789 = vmatprep.subr.mxu0 %v637
        %790 = vmatpush1.msra.mxu0 %v636
        %791 = vmatprep.subr.mxu0 %v635
        %792 = vmatpush1.msra.mxu0 %v634
        %793 = vmatprep.subr.mxu0 %v633
        %794 = vmatpush1.msra.mxu0 %v632
        %795 = vmatprep.subr.mxu0 %v631
        %796 = vmatpush1.msra.mxu0 %v630
        %797 = vmatprep.subr.mxu0 0.0
        %798 = vmatpush2.msra.mxu0 0.0
        %799 = vmatprep.subr.mxu0 0.0
        %800 = vmatpush2.msra.mxu0 0.0
        %801 = vmatprep.subr.mxu0 0.0
        %802 = vmatpush2.msra.mxu0 0.0
        %803 = vmatprep.subr.mxu0 0.0
        %804 = vmatpush2.msra.mxu0 0.0
        %805 = vmatprep.subr.mxu0 0.0
        %806 = vmatpush2.msra.mxu0 0.0
        %807 = vmatprep.subr.mxu0 0.0
        %808 = vmatpush2.msra.mxu0 0.0
        %809 = vmatprep.subr.mxu0 0.0
        %810 = vmatpush2.msra.mxu0 0.0
        %811 = vmatprep.subr.mxu0 0.0
        %812 = vmatpush2.msra.mxu0 0.0
        %813 = vmatprep.subr.mxu0 0.0
        %814 = vmatpush2.msra.mxu0 0.0
        %815 = vmatprep.subr.mxu0 0.0
        %816 = vmatpush2.msra.mxu0 0.0
        %817 = vmatprep.subr.mxu0 0.0
        %818 = vmatpush2.msra.mxu0 0.0
        %819 = vmatprep.subr.mxu0 0.0
        %820 = vmatpush2.msra.mxu0 0.0
        %821 = vmatprep.subr.mxu0 0.0
        %822 = vmatpush2.msra.mxu0 0.0
        %823 = vmatprep.subr.mxu0 0.0
        %824 = vmatpush2.msra.mxu0 0.0
        %825 = vmatprep.subr.mxu0 0.0
        %826 = vmatpush2.msra.mxu0 0.0
        %827 = vmatprep.subr.mxu0 0.0
        %828 = vmatpush2.msra.mxu0 0.0
        %829 = vmatprep.mubr.f32.mxu0 0.0
        %830 = vmatmul.mubr.f32.gmra.mxu0 %v525
        %v831 = vpop.f32.mrf.mxu0
        %v832 = vadd.f32 %v761, %v831
        %v833 = vpop.f32.mrf.mxu0
        %v834 = vadd.f32 %v763, %v833
        %835 = vdwg.mxu0
        %v836 = vld [vmem:[%s4] sm:$0x3]
        %v838 = vlaneseq
        %v839 = vshrl.u32 %v838, 7
        %v840 = vsub.s32 0, %v839
        %v841 = vrot.slane %v836, %v840
        %v842 = vlaneseq
        %v843 = vshrl.u32 %v842, 7
        %v844 = vsub.s32 1, %v843
        %v845 = vrot.slane %v836, %v844
        %v848 = vadd.f32 %v832, %v841
        %v849 = vadd.f32 %v834, %v845
        %v850 = vxor.u32 %v848, 2147483648
        %v851 = vxor.u32 %v849, 2147483648
        %v852 = vmul.f32 %v850, 1.442695
        %v853 = vpow.pop %v852
        %v854 = vmul.f32 %v851, 1.442695
        %v855 = vpow.pop %v854
        %v856 = vadd.f32 %v853, 1.0
        %v857 = vadd.f32 %v855, 1.0
        %v858 = vrcp.pop %v856
        %v859 = vmul.f32 1.0, %v858
        %v860 = vrcp.pop %v857
        %v861 = vmul.f32 1.0, %v860
        %v862 = vmul.f32 %v848, %v859
        %v863 = vmul.f32 %v849, %v861
        %v864 = vld [vmem:[%s356] sm:$0xff]
        %v865 = vld [vmem:[%s356 + $0x8] sm:$0xff]
        %v866 = vld [vmem:[%s356 + $0x10] sm:$0xff]
        %v867 = vld [vmem:[%s356 + $0x18] sm:$0xff]
        %v868 = vld [vmem:[%s356 + $0x20] sm:$0xff]
        %v869 = vld [vmem:[%s356 + $0x28] sm:$0xff]
        %v870 = vld [vmem:[%s356 + $0x30] sm:$0xff]
        %v871 = vld [vmem:[%s356 + $0x38] sm:$0xff]
        %v872 = vld [vmem:[%s356 + $0x40] sm:$0xff]
        %v873 = vld [vmem:[%s356 + $0x48] sm:$0xff]
        %v874 = vld [vmem:[%s356 + $0x50] sm:$0xff]
        %v875 = vld [vmem:[%s356 + $0x58] sm:$0xff]
        %v876 = vld [vmem:[%s356 + $0x60] sm:$0xff]
        %v877 = vld [vmem:[%s356 + $0x68] sm:$0xff]
        %v878 = vld [vmem:[%s356 + $0x70] sm:$0xff]
        %v879 = vld [vmem:[%s356 + $0x78] sm:$0xff]
        %v880 = vld [vmem:[%s356 + $0x80] sm:$0xff]
        %v881 = vld [vmem:[%s356 + $0x88] sm:$0xff]
        %v882 = vld [vmem:[%s356 + $0x90] sm:$0xff]
        %v883 = vld [vmem:[%s356 + $0x98] sm:$0xff]
        %v884 = vld [vmem:[%s356 + $0xa0] sm:$0xff]
        %v885 = vld [vmem:[%s356 + $0xa8] sm:$0xff]
        %v886 = vld [vmem:[%s356 + $0xb0] sm:$0xff]
        %v887 = vld [vmem:[%s356 + $0xb8] sm:$0xff]
        %v888 = vld [vmem:[%s356 + $0xc0] sm:$0xff]
        %v889 = vld [vmem:[%s356 + $0xc8] sm:$0xff]
        %v890 = vld [vmem:[%s356 + $0xd0] sm:$0xff]
        %v891 = vld [vmem:[%s356 + $0xd8] sm:$0xff]
        %v892 = vld [vmem:[%s356 + $0xe0] sm:$0xff]
        %v893 = vld [vmem:[%s356 + $0xe8] sm:$0xff]
        %v894 = vld [vmem:[%s356 + $0xf0] sm:$0xff]
        %v895 = vld [vmem:[%s356 + $0xf8] sm:$0xff]
        %v896 = vld [vmem:[%s408] sm:$0x1]
        %v898 = vlaneseq
        %v899 = vshrl.u32 %v898, 7
        %v900 = vsub.s32 0, %v899
        %v901 = vrot.slane %v896, %v900
        %903 = vmatprep.subr.mxu0 0.0
        %904 = vmatpush1.msra.mxu0 %v879
        %905 = vmatprep.subr.mxu0 0.0
        %906 = vmatpush1.msra.mxu0 %v878
        %907 = vmatprep.subr.mxu0 0.0
        %908 = vmatpush1.msra.mxu0 %v877
        %909 = vmatprep.subr.mxu0 0.0
        %910 = vmatpush1.msra.mxu0 %v876
        %911 = vmatprep.subr.mxu0 0.0
        %912 = vmatpush1.msra.mxu0 %v875
        %913 = vmatprep.subr.mxu0 0.0
        %914 = vmatpush1.msra.mxu0 %v874
        %915 = vmatprep.subr.mxu0 0.0
        %916 = vmatpush1.msra.mxu0 %v873
        %917 = vmatprep.subr.mxu0 0.0
        %918 = vmatpush1.msra.mxu0 %v872
        %919 = vmatprep.subr.mxu0 0.0
        %920 = vmatpush1.msra.mxu0 %v871
        %921 = vmatprep.subr.mxu0 0.0
        %922 = vmatpush1.msra.mxu0 %v870
        %923 = vmatprep.subr.mxu0 0.0
        %924 = vmatpush1.msra.mxu0 %v869
        %925 = vmatprep.subr.mxu0 0.0
        %926 = vmatpush1.msra.mxu0 %v868
        %927 = vmatprep.subr.mxu0 0.0
        %928 = vmatpush1.msra.mxu0 %v867
        %929 = vmatprep.subr.mxu0 0.0
        %930 = vmatpush1.msra.mxu0 %v866
        %931 = vmatprep.subr.mxu0 0.0
        %932 = vmatpush1.msra.mxu0 %v865
        %933 = vmatprep.subr.mxu0 0.0
        %934 = vmatpush1.msra.mxu0 %v864
        %935 = vmatprep.subr.mxu0 0.0
        %936 = vmatpush2.msra.mxu0 %v895
        %937 = vmatprep.subr.mxu0 0.0
        %938 = vmatpush2.msra.mxu0 %v894
        %939 = vmatprep.subr.mxu0 0.0
        %940 = vmatpush2.msra.mxu0 %v893
        %941 = vmatprep.subr.mxu0 0.0
        %942 = vmatpush2.msra.mxu0 %v892
        %943 = vmatprep.subr.mxu0 0.0
        %944 = vmatpush2.msra.mxu0 %v891
        %945 = vmatprep.subr.mxu0 0.0
        %946 = vmatpush2.msra.mxu0 %v890
        %947 = vmatprep.subr.mxu0 0.0
        %948 = vmatpush2.msra.mxu0 %v889
        %949 = vmatprep.subr.mxu0 0.0
        %950 = vmatpush2.msra.mxu0 %v888
        %951 = vmatprep.subr.mxu0 0.0
        %952 = vmatpush2.msra.mxu0 %v887
        %953 = vmatprep.subr.mxu0 0.0
        %954 = vmatpush2.msra.mxu0 %v886
        %955 = vmatprep.subr.mxu0 0.0
        %956 = vmatpush2.msra.mxu0 %v885
        %957 = vmatprep.subr.mxu0 0.0
        %958 = vmatpush2.msra.mxu0 %v884
        %959 = vmatprep.subr.mxu0 0.0
        %960 = vmatpush2.msra.mxu0 %v883
        %961 = vmatprep.subr.mxu0 0.0
        %962 = vmatpush2.msra.mxu0 %v882
        %963 = vmatprep.subr.mxu0 0.0
        %964 = vmatpush2.msra.mxu0 %v881
        %965 = vmatprep.subr.mxu0 0.0
        %966 = vmatpush2.msra.mxu0 %v880
        %967 = vmatprep.mubr.f32.mxu0 %v863
        %968 = vmatmul.mubr.f32.gmra.mxu0 %v862
        %v969 = vpop.f32.mrf.mxu0
        %v970 = vadd.f32 %v901, %v969
        %v971 = vpop.f32.mrf.mxu0
        %972 = vdwg.mxu0
        %973 = vst [vmem:[%s398] sm:$0xff] %v970
        %s974 = sand.u32 %s234, 1
        %s975 = scalar_lea.sflag [#allocation4], %s974
        %s976 = sand.u32 %s234, 1
        %s977 = smul.addr %s976, 8
        %s978 = scalar_lea.vmem [#allocation8], %s977
        // Predicated region
        $region65: #{tpu_custom_call.1} parent=51 // pred_check
          %p979 = pneg %p244
        $region66: #{tpu_custom_call.1} parent=51 // pred_check_branch
          %981 = sbr.rel (%p979) target = $region68
        $region67: #{tpu_custom_call.1} parent=51 // pred_region
          %s983 = ssub.s32 128, 128
          %984 = vsyncadd %s975, %s983
          %s985 = smul.addr %s29, 2
          %s986 = sadd.s32 %s28, %s985
          %s987 = smul.addr %s986, 128
          %s988 = scalar_lea.hbm %s8, %s987
          %s990 = sshll.u32 %s978, 4
          %s991 = int_to_ptr.vmem [resolvable:$true] %s990
          %993 = dma.vmem_to_hbm [thread:$0]  %s991, 128, %s988, %s975
        $region68: #{tpu_custom_call.1} parent=51 // pred_fallthru
          _
      $region52: #{tpu_custom_call.1} parent=5 // pred_fallthru
        _
      %p994 = scmp.le.s32.totalorder 2, %s19
      // Predicated region
      $region69: #{tpu_custom_call.1} parent=5 // pred_check
        %p995 = pneg %p994
      $region70: #{tpu_custom_call.1} parent=5 // pred_check_branch
        %997 = sbr.rel (%p995) target = $region72
      $region71: #{tpu_custom_call.1} parent=5 // pred_region
        %s998 = ssub.s32 %s19, 2
        // Predicated region
        $region73: #{tpu_custom_call.1} parent=71 // pred_check
          %p999 = pneg %p250
        $region74: #{tpu_custom_call.1} parent=71 // pred_check_branch
          %1001 = sbr.rel (%p999) target = $region76
        $region75: #{tpu_custom_call.1} parent=71 // pred_region
          %s1002 = sand.u32 %s235, 1
          %s1003 = scalar_lea.sflag [#allocation4], %s1002
          %s1004 = sand.u32 %s235, 1
          %s1005 = smul.addr %s1004, 8
          %s1006 = scalar_lea.vmem [#allocation8], %s1005
          %1007 = dma.done %s1003, 128
        $region76: #{tpu_custom_call.1} parent=71 // pred_fallthru
          _
      $region72: #{tpu_custom_call.1} parent=5 // pred_fallthru
        _
    $region6: #{tpu_custom_call.1} parent=1 // loop_footer
      %s23 = sadd.s32 1, %s19
    $region7: #{tpu_custom_call.1} parent=1 // loop_footer_branch
      %18 = sbr.rel target = $region3
    $region8: #{tpu_custom_call.1} parent=1 // loop_exit
      _
    %1008 = vsyncpa [#allocation3], 1
    %s1009 = scalar_lea.sflag [#allocation3], 1
    %1010 = vsyncpa %s1009, 1
    %1011 = vsyncpa [#allocation6], 1
    %1012 = vsyncpa [#allocation4], 1
    %s1013 = scalar_lea.sflag [#allocation4], 1
    %1014 = vsyncpa %s1013, 1

// kernel: tpu_custom_call.1
$region0: #{tpu_custom_call.1}
  #allocation0 [shape = 'u32[]', space=smem, size = 0x4, offset = 0x4, fixed_abs, tag = 'smem constant byte address 0x4 - core index']
  #allocation1 [shape = 'u32[144,128]{1,0:T(1,128)}', space=vmem, size = 0x12000, scoped, tag = 'internal scratch']
  %s0 = inlined_call_operand.vmem [shape: f32[8,1], index: 0, kind: input, shape index: {}]
  %s1 = inlined_call_operand.vmem [shape: f32[1,128], index: 1, kind: input, shape index: {}]
  %s2 = inlined_call_operand.hbm [shape: f32[128,256], index: 2, kind: input, shape index: {}]
  %s3 = inlined_call_operand.hbm [shape: f32[128,256], index: 3, kind: input, shape index: {}]
  %s4 = inlined_call_operand.vmem [shape: f32[1,256], index: 4, kind: input, shape index: {}]
  %s5 = inlined_call_operand.hbm [shape: f32[256,256], index: 5, kind: input, shape index: {}]
  %s6 = inlined_call_operand.vmem [shape: f32[1,256], index: 6, kind: input, shape index: {}]
  %s7 = inlined_call_operand.vmem [shape: f32[1,256], index: 7, kind: input, shape index: {}]
  %s8 = inlined_call_operand.hbm [shape: f32[8,256], index: 8, kind: output, shape index: {}]
  %s9 = sld [smem:[#allocation0]]
  $region77: #{tpu_custom_call.1} parent=0
    _
  %s11 = ssub.s32 1, %s9
  %s12 = scalar_select 0, %s11, %s9
  $region1: #{tpu_custom_call.1} parent=0
    #allocation2 [shape = 'u8[131072]{0}', space=vmem, size = 0x20000, scoped, tag = 'input window, operand 2, single buffered']
    #allocation3 [shape = 's32[2]{0}', space=sflag, size = 0x8, scoped, tag = 'scoped memory for tpu_custom_call.1']
    #allocation4 [shape = 's32[2]{0}', space=sflag, size = 0x8, scoped, tag = 'scoped memory for tpu_custom_call.1']
    #allocation5 [shape = 'u8[131072]{0}', space=vmem, size = 0x20000, scoped, tag = 'input window, operand 3, single buffered']
    #allocation6 [shape = 's32[1]{0}', space=sflag, size = 0x4, scoped, tag = 'scoped memory for tpu_custom_call.1']
    #allocation7 [shape = 'u8[262144]{0}', space=vmem, size = 0x40000, scoped, tag = 'input window, operand 5']
    #allocation8 [shape = 'u8[8192]{0}', space=vmem, size = 0x2000, scoped, tag = 'output window, operand 0']
    %13 = vsyncpa [#allocation3], 0
    %14 = vsyncpa [#allocation6], 0
    %15 = vsyncpa [#allocation4], 0
    %s16 = scalar_lea.sflag [#allocation4], 1
    %17 = vsyncpa %s16, 0
    loop: start=0, step=1, limit=4
    $region2: #{tpu_custom_call.1} parent=1 // loop_pre_header
      _
    $region3: #{tpu_custom_call.1} parent=1 // loop_header
      %s19 = sphi 0, %s23
      %p20 = scmp.ge.s32.totalorder %s19, 4
      %s26 = sphi 0, %s38
      %s27 = sphi 0, %s34
      %s28 = sphi 0, %s26
      %s29 = sphi 0, %s27
      %s30 = sphi 0, %s28
      %s31 = sphi 0, %s29
      %s41 = sphi 0, %s43
      %s44 = sphi 0, %s41
      %s45 = sphi 0, %s44
      %s61 = sphi 0, %s45
      %s65 = sphi 0, %s65
      %s67 = sphi 0, %s65
      %s68 = sphi 0, %s67
      %s82 = sphi 0, %s68
      %s86 = sphi 0, %s86
      %s88 = sphi 0, %s86
      %s89 = sphi 0, %s88
      %s103 = sphi 0, %s89
      %s107 = sphi 0, %s107
      %s109 = sphi 0, %s107
      %s110 = sphi 0, %s109
      %s124 = sphi 0, %s110
      %s128 = sphi 0, %s128
      %s130 = sphi 0, %s128
      %s131 = sphi 0, %s130
      %s145 = sphi 0, %s131
      %s151 = sphi 0, %s153
      %s154 = sphi 0, %s151
      %s155 = sphi 0, %s154
      %s171 = sphi 0, %s155
      %s177 = sphi 0, %s179
      %s180 = sphi 0, %s177
      %s181 = sphi 0, %s180
      %s197 = sphi 0, %s181
      %s203 = sphi 0, %s205
      %s206 = sphi 0, %s203
      %s207 = sphi 0, %s206
      %s223 = sphi 0, %s207
      %s231 = sphi 0, %s233
      %s234 = sphi 0, %s231
      %s235 = sphi 0, %s234
      %s251 = sphi 0, %s235
    $region4: #{tpu_custom_call.1} parent=1 // loop_header_branch
      %22 = sbr.rel (%p20) target = $region8
    $region5: #{tpu_custom_call.1} parent=1 // loop_body
      %s24 = ssub.s32 %s19, 1
      %s25 = ssub.s32 %s19, 2
      %s32 = sadd.s32 1, %s27
      %p33 = scmp.ge.s32.totalorder %s32, 1
      %s34 = scalar_select %p33, 0, %s32
      %s35 = sadd.s32 1, %s26
      %s36 = scalar_select %p33, %s35, %s26
      %p37 = scmp.ge.s32.totalorder %s36, 2
      %s38 = scalar_select %p37, 0, %s36
      %s39 = ssub.s32 %s27, %s34
      %p40 = scmp.eq.s32.totalorder %s39, 0
      %s42 = sadd.s32 %s41, 1
      %s43 = scalar_select %p40, %s41, %s42
      %p46 = pneg %p40
      %p47 = scmp.eq.s32.totalorder %s19, 1
      %p48 = por %p46, %p47
      %p49 = scmp.ne.s32.totalorder %s41, %s44
      %p50 = scmp.eq.s32.totalorder %s19, 0
      %p51 = por %p49, %p50
      %p52 = scmp.ne.s32.totalorder %s41, %s44
      %p53 = scmp.eq.s32.totalorder %s24, 1
      %p54 = por %p52, %p53
      %p55 = scmp.ne.s32.totalorder %s44, %s45
      %p56 = scmp.eq.s32.totalorder %s24, 0
      %p57 = por %p55, %p56
      %p58 = scmp.ne.s32.totalorder %s44, %s45
      %p59 = scmp.eq.s32.totalorder %s25, 1
      %p60 = por %p58, %p59
      %p62 = scmp.ne.s32.totalorder %s45, %s61
      %p63 = scmp.eq.s32.totalorder %s25, 0
      %p64 = por %p62, %p63
      %s66 = sadd.s32 %s65, 1
      %p69 = scmp.eq.s32.totalorder %s19, 1
      %p70 = scmp.ne.s32.totalorder %s65, %s67
      %p71 = scmp.eq.s32.totalorder %s19, 0
      %p72 = por %p70, %p71
      %p73 = scmp.ne.s32.totalorder %s65, %s67
      %p74 = scmp.eq.s32.totalorder %s24, 1
      %p75 = por %p73, %p74
      %p76 = scmp.ne.s32.totalorder %s67, %s68
      %p77 = scmp.eq.s32.totalorder %s24, 0
      %p78 = por %p76, %p77
      %p79 = scmp.ne.s32.totalorder %s67, %s68
      %p80 = scmp.eq.s32.totalorder %s25, 1
      %p81 = por %p79, %p80
      %p83 = scmp.ne.s32.totalorder %s68, %s82
      %p84 = scmp.eq.s32.totalorder %s25, 0
      %p85 = por %p83, %p84
      %s87 = sadd.s32 %s86, 1
      %p90 = scmp.eq.s32.totalorder %s19, 1
      %p91 = scmp.ne.s32.totalorder %s86, %s88
      %p92 = scmp.eq.s32.totalorder %s19, 0
      %p93 = por %p91, %p92
      %p94 = scmp.ne.s32.totalorder %s86, %s88
      %p95 = scmp.eq.s32.totalorder %s24, 1
      %p96 = por %p94, %p95
      %p97 = scmp.ne.s32.totalorder %s88, %s89
      %p98 = scmp.eq.s32.totalorder %s24, 0
      %p99 = por %p97, %p98
      %p100 = scmp.ne.s32.totalorder %s88, %s89
      %p101 = scmp.eq.s32.totalorder %s25, 1
      %p102 = por %p100, %p101
      %p104 = scmp.ne.s32.totalorder %s89, %s103
      %p105 = scmp.eq.s32.totalorder %s25, 0
      %p106 = por %p104, %p105
      %s108 = sadd.s32 %s107, 1
      %p111 = scmp.eq.s32.totalorder %s19, 1
      %p112 = scmp.ne.s32.totalorder %s107, %s109
      %p113 = scmp.eq.s32.totalorder %s19, 0
      %p114 = por %p112, %p113
      %p115 = scmp.ne.s32.totalorder %s107, %s109
      %p116 = scmp.eq.s32.totalorder %s24, 1
      %p117 = por %p115, %p116
      %p118 = scmp.ne.s32.totalorder %s109, %s110
      %p119 = scmp.eq.s32.totalorder %s24, 0
      %p120 = por %p118, %p119
      %p121 = scmp.ne.s32.totalorder %s109, %s110
      %p122 = scmp.eq.s32.totalorder %s25, 1
      %p123 = por %p121, %p122
      %p125 = scmp.ne.s32.totalorder %s110, %s124
      %p126 = scmp.eq.s32.totalorder %s25, 0
      %p127 = por %p125, %p126
      %s129 = sadd.s32 %s128, 1
      %p132 = scmp.eq.s32.totalorder %s19, 1
      %p133 = scmp.ne.s32.totalorder %s128, %s130
      %p134 = scmp.eq.s32.totalorder %s19, 0
      %p135 = por %p133, %p134
      %p136 = scmp.ne.s32.totalorder %s128, %s130
      %p137 = scmp.eq.s32.totalorder %s24, 1
      %p138 = por %p136, %p137
      %p139 = scmp.ne.s32.totalorder %s130, %s131
      %p140 = scmp.eq.s32.totalorder %s24, 0
      %p141 = por %p139, %p140
      %p142 = scmp.ne.s32.totalorder %s130, %s131
      %p143 = scmp.eq.s32.totalorder %s25, 1
      %p144 = por %p142, %p143
      %p146 = scmp.ne.s32.totalorder %s131, %s145
      %p147 = scmp.eq.s32.totalorder %s25, 0
      %p148 = por %p146, %p147
      %s149 = ssub.s32 %s26, %s38
      %p150 = scmp.eq.s32.totalorder %s149, 0
      %s152 = sadd.s32 %s151, 1
      %s153 = scalar_select %p150, %s151, %s152
      %p156 = pneg %p150
      %p157 = scmp.eq.s32.totalorder %s19, 1
      %p158 = por %p156, %p157
      %p159 = scmp.ne.s32.totalorder %s151, %s154
      %p160 = scmp.eq.s32.totalorder %s19, 0
      %p161 = por %p159, %p160
      %p162 = scmp.ne.s32.totalorder %s151, %s154
      %p163 = scmp.eq.s32.totalorder %s24, 1
      %p164 = por %p162, %p163
      %p165 = scmp.ne.s32.totalorder %s154, %s155
      %p166 = scmp.eq.s32.totalorder %s24, 0
      %p167 = por %p165, %p166
      %p168 = scmp.ne.s32.totalorder %s154, %s155
      %p169 = scmp.eq.s32.totalorder %s25, 1
      %p170 = por %p168, %p169
      %p172 = scmp.ne.s32.totalorder %s155, %s171
      %p173 = scmp.eq.s32.totalorder %s25, 0
      %p174 = por %p172, %p173
      %s175 = ssub.s32 %s26, %s38
      %p176 = scmp.eq.s32.totalorder %s175, 0
      %s178 = sadd.s32 %s177, 1
      %s179 = scalar_select %p176, %s177, %s178
      %p182 = pneg %p176
      %p183 = scmp.eq.s32.totalorder %s19, 1
      %p184 = por %p182, %p183
      %p185 = scmp.ne.s32.totalorder %s177, %s180
      %p186 = scmp.eq.s32.totalorder %s19, 0
      %p187 = por %p185, %p186
      %p188 = scmp.ne.s32.totalorder %s177, %s180
      %p189 = scmp.eq.s32.totalorder %s24, 1
      %p190 = por %p188, %p189
      %p191 = scmp.ne.s32.totalorder %s180, %s181
      %p192 = scmp.eq.s32.totalorder %s24, 0
      %p193 = por %p191, %p192
      %p194 = scmp.ne.s32.totalorder %s180, %s181
      %p195 = scmp.eq.s32.totalorder %s25, 1
      %p196 = por %p194, %p195
      %p198 = scmp.ne.s32.totalorder %s181, %s197
      %p199 = scmp.eq.s32.totalorder %s25, 0
      %p200 = por %p198, %p199
      %s201 = ssub.s32 %s26, %s38
      %p202 = scmp.eq.s32.totalorder %s201, 0
      %s204 = sadd.s32 %s203, 1
      %s205 = scalar_select %p202, %s203, %s204
      %p208 = pneg %p202
      %p209 = scmp.eq.s32.totalorder %s19, 1
      %p210 = por %p208, %p209
      %p211 = scmp.ne.s32.totalorder %s203, %s206
      %p212 = scmp.eq.s32.totalorder %s19, 0
      %p213 = por %p211, %p212
      %p214 = scmp.ne.s32.totalorder %s203, %s206
      %p215 = scmp.eq.s32.totalorder %s24, 1
      %p216 = por %p214, %p215
      %p217 = scmp.ne.s32.totalorder %s206, %s207
      %p218 = scmp.eq.s32.totalorder %s24, 0
      %p219 = por %p217, %p218
      %p220 = scmp.ne.s32.totalorder %s206, %s207
      %p221 = scmp.eq.s32.totalorder %s25, 1
      %p222 = por %p220, %p221
      %p224 = scmp.ne.s32.totalorder %s207, %s223
      %p225 = scmp.eq.s32.totalorder %s25, 0
      %p226 = por %p224, %p225
      %s227 = ssub.s32 %s27, %s34
      %s228 = ssub.s32 %s26, %s38
      %s229 = sor.u32 %s227, %s228
      %p230 = scmp.eq.s32.totalorder %s229, 0
      %s232 = sadd.s32 %s231, 1
      %s233 = scalar_select %p230, %s231, %s232
      %p236 = pneg %p230
      %p237 = scmp.eq.s32.totalorder %s19, 1
      %p238 = por %p236, %p237
      %p239 = scmp.ne.s32.totalorder %s231, %s234
      %p240 = scmp.eq.s32.totalorder %s19, 0
      %p241 = por %p239, %p240
      %p242 = scmp.ne.s32.totalorder %s231, %s234
      %p243 = scmp.eq.s32.totalorder %s24, 1
      %p244 = por %p242, %p243
      %p245 = scmp.ne.s32.totalorder %s234, %s235
      %p246 = scmp.eq.s32.totalorder %s24, 0
      %p247 = por %p245, %p246
      %p248 = scmp.ne.s32.totalorder %s234, %s235
      %p249 = scmp.eq.s32.totalorder %s25, 1
      %p250 = por %p248, %p249
      %p252 = scmp.ne.s32.totalorder %s235, %s251
      %p253 = scmp.eq.s32.totalorder %s25, 0
      %p254 = por %p252, %p253
      %p255 = scmp.le.s32.totalorder 1, %s19
      %p256 = scmp.lt.s32.totalorder %s19, 3
      %p257 = pnand %p255, %p256
      %p258 = pneg %p257
      // Predicated region
      $region9: #{tpu_custom_call.1} parent=5 // pred_check
        _
      $region10: #{tpu_custom_call.1} parent=5 // pred_check_branch
        %260 = sbr.rel (%p257) target = $region12
      $region11: #{tpu_custom_call.1} parent=5 // pred_region
        %s261 = ssub.s32 %s19, 1
        // Predicated region
        $region13: #{tpu_custom_call.1} parent=11 // pred_check
          %p262 = pneg %p57
        $region14: #{tpu_custom_call.1} parent=11 // pred_check_branch
          %264 = sbr.rel (%p262) target = $region16
        $region15: #{tpu_custom_call.1} parent=11 // pred_region
          %p265 = scmp.lt.s32.totalorder %s29, 0
          %s266 = scalar_select %p265, %s29, 0
          %s267 = smul.addr %s266, 8
          %s268 = scalar_lea.vmem %s0, %s267
        $region16: #{tpu_custom_call.1} parent=11 // pred_fallthru
          _
        // Predicated region
        $region17: #{tpu_custom_call.1} parent=11 // pred_check
          %p269 = pneg %p78
        $region18: #{tpu_custom_call.1} parent=11 // pred_check_branch
          %271 = sbr.rel (%p269) target = $region20
        $region19: #{tpu_custom_call.1} parent=11 // pred_region
          _
        $region20: #{tpu_custom_call.1} parent=11 // pred_fallthru
          _
        // Predicated region
        $region21: #{tpu_custom_call.1} parent=11 // pred_check
          %p272 = pneg %p99
        $region22: #{tpu_custom_call.1} parent=11 // pred_check_branch
          %274 = sbr.rel (%p272) target = $region24
        $region23: #{tpu_custom_call.1} parent=11 // pred_region
          %s276 = ssub.s32 4096, 4096
          %277 = vsyncadd [#allocation3], %s276
          %s278 = sshll.u32 [#allocation2], 4
          %s279 = int_to_ptr.vmem [resolvable:$true] %s278
          %284 = dma.hbm_to_vmem [thread:$0]  %s2, 4096, %s279, [#allocation3], 256, 256, 16
        $region24: #{tpu_custom_call.1} parent=11 // pred_fallthru
          _
        // Predicated region
        $region25: #{tpu_custom_call.1} parent=11 // pred_check
          %p285 = pneg %p120
        $region26: #{tpu_custom_call.1} parent=11 // pred_check_branch
          %287 = sbr.rel (%p285) target = $region28
        $region27: #{tpu_custom_call.1} parent=11 // pred_region
          %s289 = ssub.s32 4096, 4096
          %290 = vsyncadd [#allocation6], %s289
          %s291 = sshll.u32 [#allocation5], 4
          %s292 = int_to_ptr.vmem [resolvable:$true] %s291
          %297 = dma.hbm_to_vmem [thread:$0]  %s3, 4096, %s292, [#allocation6], 256, 256, 16
        $region28: #{tpu_custom_call.1} parent=11 // pred_fallthru
          _
        // Predicated region
        $region29: #{tpu_custom_call.1} parent=11 // pred_check
          %p298 = pneg %p141
        $region30: #{tpu_custom_call.1} parent=11 // pred_check_branch
          %300 = sbr.rel (%p298) target = $region32
        $region31: #{tpu_custom_call.1} parent=11 // pred_region
          _
        $region32: #{tpu_custom_call.1} parent=11 // pred_fallthru
          _
      $region12: #{tpu_custom_call.1} parent=5 // pred_fallthru
        _
      %p301 = scmp.lt.s32.totalorder %s19, 2
      // Predicated region
      $region33: #{tpu_custom_call.1} parent=5 // pred_check
        %p302 = pneg %p301
      $region34: #{tpu_custom_call.1} parent=5 // pred_check_branch
        %304 = sbr.rel (%p302) target = $region36
      $region35: #{tpu_custom_call.1} parent=5 // pred_region
        // Predicated region
        $region37: #{tpu_custom_call.1} parent=35 // pred_check
          %p305 = pneg %p161
        $region38: #{tpu_custom_call.1} parent=35 // pred_check_branch
          %307 = sbr.rel (%p305) target = $region40
        $region39: #{tpu_custom_call.1} parent=35 // pred_region
          %s308 = sand.u32 %s19, 1
          %s309 = scalar_lea.sflag [#allocation3], %s308
          %s310 = sand.u32 %s151, 1
          %s311 = smul.addr %s310, 256
          %s312 = scalar_lea.vmem [#allocation7], %s311
          %s314 = ssub.s32 4096, 4096
          %315 = vsyncadd %s309, %s314
          %s316 = smul.addr %s26, 128
          %s317 = scalar_lea.hbm %s5, %s316
          %s318 = sshll.u32 %s312, 4
          %s319 = int_to_ptr.vmem [resolvable:$true] %s318
          %324 = dma.hbm_to_vmem [thread:$0]  %s317, 4096, %s319, %s309, 256, 128, 8
        $region40: #{tpu_custom_call.1} parent=35 // pred_fallthru
          _
        // Predicated region
        $region41: #{tpu_custom_call.1} parent=35 // pred_check
          %p325 = pneg %p187
        $region42: #{tpu_custom_call.1} parent=35 // pred_check_branch
          %327 = sbr.rel (%p325) target = $region44
        $region43: #{tpu_custom_call.1} parent=35 // pred_region
          %p328 = scmp.lt.s32.totalorder %s26, 1
          %s329 = scalar_select %p328, %s26, 1
          %s330 = scalar_lea.vmem %s6, %s329
        $region44: #{tpu_custom_call.1} parent=35 // pred_fallthru
          _
        // Predicated region
        $region45: #{tpu_custom_call.1} parent=35 // pred_check
          %p331 = pneg %p213
        $region46: #{tpu_custom_call.1} parent=35 // pred_check_branch
          %333 = sbr.rel (%p331) target = $region48
        $region47: #{tpu_custom_call.1} parent=35 // pred_region
          %p334 = scmp.lt.s32.totalorder %s26, 1
          %s335 = scalar_select %p334, %s26, 1
          %s336 = scalar_lea.vmem %s7, %s335
        $region48: #{tpu_custom_call.1} parent=35 // pred_fallthru
          _
      $region36: #{tpu_custom_call.1} parent=5 // pred_fallthru
        _
      %p337 = scmp.le.s32.totalorder 1, %s19
      %p338 = scmp.lt.s32.totalorder %s19, 3
      %p339 = pnand %p337, %p338
      %p340 = pneg %p339
      // Predicated region
      $region49: #{tpu_custom_call.1} parent=5 // pred_check
        _
      $region50: #{tpu_custom_call.1} parent=5 // pred_check_branch
        %342 = sbr.rel (%p339) target = $region52
      $region51: #{tpu_custom_call.1} parent=5 // pred_region
        %s343 = ssub.s32 %s19, 1
        // Predicated region
        $region53: #{tpu_custom_call.1} parent=51 // pred_check
          %p344 = pneg %p99
        $region54: #{tpu_custom_call.1} parent=51 // pred_check_branch
          %346 = sbr.rel (%p344) target = $region56
        $region55: #{tpu_custom_call.1} parent=51 // pred_region
          %347 = dma.done [#allocation3], 4096
        $region56: #{tpu_custom_call.1} parent=51 // pred_fallthru
          _
        // Predicated region
        $region57: #{tpu_custom_call.1} parent=51 // pred_check
          %p348 = pneg %p120
        $region58: #{tpu_custom_call.1} parent=51 // pred_check_branch
          %350 = sbr.rel (%p348) target = $region60
        $region59: #{tpu_custom_call.1} parent=51 // pred_region
          %351 = dma.done [#allocation6], 4096
        $region60: #{tpu_custom_call.1} parent=51 // pred_fallthru
          _
        %s352 = sand.u32 %s24, 1
        %s353 = scalar_lea.sflag [#allocation3], %s352
        %s354 = sand.u32 %s154, 1
        %s355 = smul.addr %s354, 256
        %s356 = scalar_lea.vmem [#allocation7], %s355
        // Predicated region
        $region61: #{tpu_custom_call.1} parent=51 // pred_check
          %p357 = pneg %p167
        $region62: #{tpu_custom_call.1} parent=51 // pred_check_branch
          %359 = sbr.rel (%p357) target = $region64
        $region63: #{tpu_custom_call.1} parent=51 // pred_region
          %360 = dma.done %s353, 4096
        $region64: #{tpu_custom_call.1} parent=51 // pred_fallthru
          _
        %p361 = scmp.lt.s32.totalorder %s29, 0
        %s362 = scalar_select %p361, %s29, 0
        %s363 = smul.addr %s362, 8
        %s364 = scalar_lea.vmem %s0, %s363
        %p365 = pneg %p57
        %p366 = pneg %p54
        %p367 = pneg %p78
        %p368 = pneg %p75
        %p369 = pneg %p99
        %p370 = pneg %p96
        %p371 = pneg %p120
        %p372 = pneg %p117
        %p373 = pneg %p141
        %p374 = pneg %p138
        %s375 = sand.u32 %s24, 1
        %s376 = scalar_lea.sflag [#allocation3], %s375
        %s377 = sand.u32 %s154, 1
        %s378 = smul.addr %s377, 256
        %s379 = scalar_lea.vmem [#allocation7], %s378
        %p380 = pneg %p167
        %p381 = pneg %p164
        %p382 = scmp.lt.s32.totalorder %s28, 1
        %s383 = scalar_select %p382, %s28, 1
        %s384 = scalar_lea.vmem %s6, %s383
        %p385 = pneg %p193
        %p386 = pneg %p190
        %p387 = scmp.lt.s32.totalorder %s28, 1
        %s388 = scalar_select %p387, %s28, 1
        %s389 = scalar_lea.vmem %s7, %s388
        %p390 = pneg %p219
        %p391 = pneg %p216
        %p392 = pneg %p247
        %p393 = pneg %p244
        %s394 = sand.u32 %s234, 1
        %s395 = scalar_lea.sflag [#allocation4], %s394
        %s396 = sand.u32 %s234, 1
        %s397 = smul.addr %s396, 8
        %s398 = scalar_lea.vmem [#allocation8], %s397
        %p399 = scmp.lt.s32.totalorder %s29, 0
        %s400 = scalar_select %p399, %s29, 0
        %s401 = smul.addr %s400, 8
        %s402 = scalar_lea.vmem %s0, %s401
        %p403 = scmp.lt.s32.totalorder %s28, 1
        %s404 = scalar_select %p403, %s28, 1
        %s405 = scalar_lea.vmem %s6, %s404
        %p406 = scmp.lt.s32.totalorder %s28, 1
        %s407 = scalar_select %p406, %s28, 1
        %s408 = scalar_lea.vmem %s7, %s407
        %v409 = vld [vmem:[%s402] sm:$0xff]
        %v410 = vld [vmem:[%s1] sm:$0x1]
        %412 = vset.pattern.permute.xlu0 0
        %413 = vperm.xlu0 %412, %v409
        %v414 = vpop.permute.xlu0 %413
        %v417 = vlaneseq
        %v418 = vshrl.u32 %v417, 7
        %v419 = vsub.s32 0, %v418
        %v420 = vrot.slane %v410, %v419
        %v422 = vmul.f32 %v414, %v420
        %v423 = vand.u32 2147483647, %v422
        %vm424 = vcmp.le.f32.partialorder %v423, 0.7853982
        %vm425 = vcmp.lt.s32.totalorder %v422, 0
        %v426 = vand.u32 %v422, 2139095040
        %v427 = vshrl.u32 %v426, 23
        %v428 = vsub.s32 %v427, 127
        %v429 = vand.u32 2147483647, %v422
        %v430 = vand.u32 %v429, 8388607
        %v431 = vor.u32 %v430, 8388608
        %v432 = vsub.s32 0, %v431
        %v433 = vadd.s32 %v428, 1
        %vm434 = vcmp.gt.s32.totalorder %v433, 0
        %v435 = vsel %vm434, %v433, 0
        %v436 = vshrl.u32 %v435, 5
        %v437 = vand.u32 %v435, 31
        %v438 = vsub.s32 32, %v437
        %v439 = vshrl.u32 683565275, %v438
        %v440 = vshll.u32 683565275, %v437
        %v441 = vshrl.u32 2475754826, %v438
        %v442 = vor.u32 %v440, %v441
        %v443 = vshll.u32 2475754826, %v437
        %v444 = vshrl.u32 2131351028, %v438
        %v445 = vor.u32 %v443, %v444
        %v446 = vshll.u32 2131351028, %v437
        %v447 = vshrl.u32 2102212464, %v438
        %v448 = vor.u32 %v446, %v447
        %v449 = vshll.u32 2102212464, %v437
        %v450 = vshrl.u32 920167782, %v438
        %v451 = vor.u32 %v449, %v450
        %v452 = vshll.u32 920167782, %v437
        %v453 = vshrl.u32 1326507024, %v438
        %v454 = vor.u32 %v452, %v453
        %vm455 = vcmp.lt.s32.totalorder %v436, 1
        %vm456 = vcmp.lt.s32.totalorder %v436, 2
        %vm457 = vcmp.lt.s32.totalorder %v436, 3
        %vm458 = vcmp.lt.s32.totalorder %v436, 4
        %v459 = vsel %vm455, %v439, %v442
        %v460 = vsel %vm458, %v448, 2102212464
        %v461 = vsel %vm457, %v445, %v460
        %v462 = vsel %vm456, %v459, %v461
        %v463 = vsel %vm455, %v442, %v445
        %v464 = vsel %vm458, %v451, 920167782
        %v465 = vsel %vm457, %v448, %v464
        %v466 = vsel %vm456, %v463, %v465
        %v467 = vsel %vm455, %v445, %v448
        %v468 = vsel %vm458, %v454, 1326507024
        %v469 = vsel %vm457, %v451, %v468
        %v470 = vsel %vm456, %v467, %v469
        %v471 = vshll.u32 %v431, 8
        %v472 = vmul.u32.u64.compose %v471, %v470
        %v473 = vextract.low.u32 %v472
        %v474 = vextract.high.u32 %v472
        %v475 = vmul.u32.u64.compose %v471, %v466
        %v476 = vextract.low.u32 %v475
        %v477 = vextract.high.u32 %v475
        %v478 = vmul.u32 %v471, %v462
        %v479 = vadd.s32 %v474, %v476
        %vm480 = vc.u32 %v474, %v476
        %v481 = vadd.s32 %v477, 1
        %v482 = vsel %vm480, %v481, %v477
        %v483 = vadd.s32 %v478, %v482
        %v484 = vadd.s32 %v483, 536870912
        %v485 = vshrl.u32 %v484, 30
        %v486 = vshll.u32 %v485, 30
        %v487 = vsub.s32 %v483, %v486
        %vm488 = vcmp.lt.s32.totalorder %v487, 0
        %v489 = vsub.s32 0, %v487
        %v490 = vsel %vm488, %v489, %v487
        %v491 = vclz %v490
        %v492 = vsub.s32 %v491, 2
        %vm493 = vcmp.gt.s32.totalorder 0, %v492
        %v494 = vsel %vm493, 0, %v492
        %v495 = vsub.s32 32, %v494
        %v496 = vshll.u32 %v487, %v494
        %v497 = vshrl.u32 %v479, %v495
        %v498 = vor.u32 %v496, %v497
        %v499 = vsub.s32 4294967266, %v494
        %v500 = vadd.s32 %v499, 127
        %v501 = vshll.u32 %v500, 23
        %v502 = vor.u32 4788187, %v501
        %v503 = vand.u32 2147483647, %v502
        %v505 = vcvt.s32.f32 %v498
        %v506 = vmul.f32 %v505, %v503
        %v507 = vxor.u32 %v506, 2147483648
        %v508 = vsel %vm425, %v507, %v506
        %v509 = vsub.s32 4, %v485
        %v510 = vsel %vm425, %v509, %v485
        %v511 = vsel %vm424, %v422, %v508
        %v512 = vsel %vm424, 0, %v510
        %v513 = vcosq.f32.pop %v511
        %v514 = vsinq.f32.pop %v511
        %vm515 = vweird.f32 %v422
        %v516 = vand.u32 %v512, 3
        %vm517 = vcmp.lt.s32.totalorder %v516, 2
        %vm518 = vcmp.eq.s32.totalorder %v516, 0
        %v519 = vxor.u32 %v514, 2147483648
        %v520 = vsel %vm518, %v513, %v519
        %vm521 = vcmp.eq.s32.totalorder %v516, 2
        %v522 = vxor.u32 %v513, 2147483648
        %v523 = vsel %vm521, %v522, %v514
        %v524 = vsel %vm517, %v520, %v523
        %v525 = vsel %vm515, nan, %v524
        %v526 = vand.u32 2147483647, %v422
        %vm527 = vcmp.le.f32.partialorder %v526, 0.7853982
        %vm528 = vcmp.lt.s32.totalorder %v422, 0
        %v529 = vand.u32 %v422, 2139095040
        %v530 = vshrl.u32 %v529, 23
        %v531 = vsub.s32 %v530, 127
        %v532 = vand.u32 2147483647, %v422
        %v533 = vand.u32 %v532, 8388607
        %v534 = vor.u32 %v533, 8388608
        %v535 = vsub.s32 0, %v534
        %v536 = vadd.s32 %v531, 1
        %vm537 = vcmp.gt.s32.totalorder %v536, 0
        %v538 = vsel %vm537, %v536, 0
        %v539 = vshrl.u32 %v538, 5
        %v540 = vand.u32 %v538, 31
        %v541 = vsub.s32 32, %v540
        %v542 = vshrl.u32 683565275, %v541
        %v543 = vshll.u32 683565275, %v540
        %v544 = vshrl.u32 2475754826, %v541
        %v545 = vor.u32 %v543, %v544
        %v546 = vshll.u32 2475754826, %v540
        %v547 = vshrl.u32 2131351028, %v541
        %v548 = vor.u32 %v546, %v547
        %v549 = vshll.u32 2131351028, %v540
        %v550 = vshrl.u32 2102212464, %v541
        %v551 = vor.u32 %v549, %v550
        %v552 = vshll.u32 2102212464, %v540
        %v553 = vshrl.u32 920167782, %v541
        %v554 = vor.u32 %v552, %v553
        %v555 = vshll.u32 920167782, %v540
        %v556 = vshrl.u32 1326507024, %v541
        %v557 = vor.u32 %v555, %v556
        %vm558 = vcmp.lt.s32.totalorder %v539, 1
        %vm559 = vcmp.lt.s32.totalorder %v539, 2
        %vm560 = vcmp.lt.s32.totalorder %v539, 3
        %vm561 = vcmp.lt.s32.totalorder %v539, 4
        %v562 = vsel %vm558, %v542, %v545
        %v563 = vsel %vm561, %v551, 2102212464
        %v564 = vsel %vm560, %v548, %v563
        %v565 = vsel %vm559, %v562, %v564
        %v566 = vsel %vm558, %v545, %v548
        %v567 = vsel %vm561, %v554, 920167782
        %v568 = vsel %vm560, %v551, %v567
        %v569 = vsel %vm559, %v566, %v568
        %v570 = vsel %vm558, %v548, %v551
        %v571 = vsel %vm561, %v557, 1326507024
        %v572 = vsel %vm560, %v554, %v571
        %v573 = vsel %vm559, %v570, %v572
        %v574 = vshll.u32 %v534, 8
        %v575 = vmul.u32.u64.compose %v574, %v573
        %v576 = vextract.low.u32 %v575
        %v577 = vextract.high.u32 %v575
        %v578 = vmul.u32.u64.compose %v574, %v569
        %v579 = vextract.low.u32 %v578
        %v580 = vextract.high.u32 %v578
        %v581 = vmul.u32 %v574, %v565
        %v582 = vadd.s32 %v577, %v579
        %vm583 = vc.u32 %v577, %v579
        %v584 = vadd.s32 %v580, 1
        %v585 = vsel %vm583, %v584, %v580
        %v586 = vadd.s32 %v581, %v585
        %v587 = vadd.s32 %v586, 536870912
        %v588 = vshrl.u32 %v587, 30
        %v589 = vshll.u32 %v588, 30
        %v590 = vsub.s32 %v586, %v589
        %vm591 = vcmp.lt.s32.totalorder %v590, 0
        %v592 = vsub.s32 0, %v590
        %v593 = vsel %vm591, %v592, %v590
        %v594 = vclz %v593
        %v595 = vsub.s32 %v594, 2
        %vm596 = vcmp.gt.s32.totalorder 0, %v595
        %v597 = vsel %vm596, 0, %v595
        %v598 = vsub.s32 32, %v597
        %v599 = vshll.u32 %v590, %v597
        %v600 = vshrl.u32 %v582, %v598
        %v601 = vor.u32 %v599, %v600
        %v602 = vsub.s32 4294967266, %v597
        %v603 = vadd.s32 %v602, 127
        %v604 = vshll.u32 %v603, 23
        %v605 = vor.u32 4788187, %v604
        %v606 = vand.u32 2147483647, %v605
        %v608 = vcvt.s32.f32 %v601
        %v609 = vmul.f32 %v608, %v606
        %v610 = vxor.u32 %v609, 2147483648
        %v611 = vsel %vm528, %v610, %v609
        %v612 = vsub.s32 4, %v588
        %v613 = vsel %vm528, %v612, %v588
        %v614 = vsel %vm527, %v422, %v611
        %v615 = vsel %vm527, 0, %v613
        %v616 = vcosq.f32.pop %v614
        %v617 = vsinq.f32.pop %v614
        %vm618 = vweird.f32 %v422
        %v619 = vadd.s32 %v615, 3
        %v620 = vand.u32 %v619, 3
        %vm621 = vcmp.lt.s32.totalorder %v620, 2
        %vm622 = vcmp.eq.s32.totalorder %v620, 0
        %v623 = vxor.u32 %v617, 2147483648
        %v624 = vsel %vm622, %v616, %v623
        %vm625 = vcmp.eq.s32.totalorder %v620, 2
        %v626 = vxor.u32 %v616, 2147483648
        %v627 = vsel %vm625, %v626, %v617
        %v628 = vsel %vm621, %v624, %v627
        %v629 = vsel %vm618, nan, %v628
        %v630 = vld [vmem:[#allocation2] sm:$0xff]
        %v631 = vld [vmem:[#allocation2 + $0x8] sm:$0xff]
        %v632 = vld [vmem:[#allocation2 + $0x10] sm:$0xff]
        %v633 = vld [vmem:[#allocation2 + $0x18] sm:$0xff]
        %v634 = vld [vmem:[#allocation2 + $0x20] sm:$0xff]
        %v635 = vld [vmem:[#allocation2 + $0x28] sm:$0xff]
        %v636 = vld [vmem:[#allocation2 + $0x30] sm:$0xff]
        %v637 = vld [vmem:[#allocation2 + $0x38] sm:$0xff]
        %v638 = vld [vmem:[#allocation2 + $0x40] sm:$0xff]
        %v639 = vld [vmem:[#allocation2 + $0x48] sm:$0xff]
        %v640 = vld [vmem:[#allocation2 + $0x50] sm:$0xff]
        %v641 = vld [vmem:[#allocation2 + $0x58] sm:$0xff]
        %v642 = vld [vmem:[#allocation2 + $0x60] sm:$0xff]
        %v643 = vld [vmem:[#allocation2 + $0x68] sm:$0xff]
        %v644 = vld [vmem:[#allocation2 + $0x70] sm:$0xff]
        %v645 = vld [vmem:[#allocation2 + $0x78] sm:$0xff]
        %v646 = vld [vmem:[#allocation2 + $0x80] sm:$0xff]
        %v647 = vld [vmem:[#allocation2 + $0x88] sm:$0xff]
        %v648 = vld [vmem:[#allocation2 + $0x90] sm:$0xff]
        %v649 = vld [vmem:[#allocation2 + $0x98] sm:$0xff]
        %v650 = vld [vmem:[#allocation2 + $0xa0] sm:$0xff]
        %v651 = vld [vmem:[#allocation2 + $0xa8] sm:$0xff]
        %v652 = vld [vmem:[#allocation2 + $0xb0] sm:$0xff]
        %v653 = vld [vmem:[#allocation2 + $0xb8] sm:$0xff]
        %v654 = vld [vmem:[#allocation2 + $0xc0] sm:$0xff]
        %v655 = vld [vmem:[#allocation2 + $0xc8] sm:$0xff]
        %v656 = vld [vmem:[#allocation2 + $0xd0] sm:$0xff]
        %v657 = vld [vmem:[#allocation2 + $0xd8] sm:$0xff]
        %v658 = vld [vmem:[#allocation2 + $0xe0] sm:$0xff]
        %v659 = vld [vmem:[#allocation2 + $0xe8] sm:$0xff]
        %v660 = vld [vmem:[#allocation2 + $0xf0] sm:$0xff]
        %v661 = vld [vmem:[#allocation2 + $0xf8] sm:$0xff]
        %v662 = vld [vmem:[#allocation5] sm:$0xff]
        %v663 = vld [vmem:[#allocation5 + $0x8] sm:$0xff]
        %v664 = vld [vmem:[#allocation5 + $0x10] sm:$0xff]
        %v665 = vld [vmem:[#allocation5 + $0x18] sm:$0xff]
        %v666 = vld [vmem:[#allocation5 + $0x20] sm:$0xff]
        %v667 = vld [vmem:[#allocation5 + $0x28] sm:$0xff]
        %v668 = vld [vmem:[#allocation5 + $0x30] sm:$0xff]
        %v669 = vld [vmem:[#allocation5 + $0x38] sm:$0xff]
        %v670 = vld [vmem:[#allocation5 + $0x40] sm:$0xff]
        %v671 = vld [vmem:[#allocation5 + $0x48] sm:$0xff]
        %v672 = vld [vmem:[#allocation5 + $0x50] sm:$0xff]
        %v673 = vld [vmem:[#allocation5 + $0x58] sm:$0xff]
        %v674 = vld [vmem:[#allocation5 + $0x60] sm:$0xff]
        %v675 = vld [vmem:[#allocation5 + $0x68] sm:$0xff]
        %v676 = vld [vmem:[#allocation5 + $0x70] sm:$0xff]
        %v677 = vld [vmem:[#allocation5 + $0x78] sm:$0xff]
        %v678 = vld [vmem:[#allocation5 + $0x80] sm:$0xff]
        %v679 = vld [vmem:[#allocation5 + $0x88] sm:$0xff]
        %v680 = vld [vmem:[#allocation5 + $0x90] sm:$0xff]
        %v681 = vld [vmem:[#allocation5 + $0x98] sm:$0xff]
        %v682 = vld [vmem:[#allocation5 + $0xa0] sm:$0xff]
        %v683 = vld [vmem:[#allocation5 + $0xa8] sm:$0xff]
        %v684 = vld [vmem:[#allocation5 + $0xb0] sm:$0xff]
        %v685 = vld [vmem:[#allocation5 + $0xb8] sm:$0xff]
        %v686 = vld [vmem:[#allocation5 + $0xc0] sm:$0xff]
        %v687 = vld [vmem:[#allocation5 + $0xc8] sm:$0xff]
        %v688 = vld [vmem:[#allocation5 + $0xd0] sm:$0xff]
        %v689 = vld [vmem:[#allocation5 + $0xd8] sm:$0xff]
        %v690 = vld [vmem:[#allocation5 + $0xe0] sm:$0xff]
        %v691 = vld [vmem:[#allocation5 + $0xe8] sm:$0xff]
        %v692 = vld [vmem:[#allocation5 + $0xf0] sm:$0xff]
        %v693 = vld [vmem:[#allocation5 + $0xf8] sm:$0xff]
        %694 = vmatprep.subr.mxu0 %v693
        %695 = vmatpush1.msra.mxu0 %v692
        %696 = vmatprep.subr.mxu0 %v691
        %697 = vmatpush1.msra.mxu0 %v690
        %698 = vmatprep.subr.mxu0 %v689
        %699 = vmatpush1.msra.mxu0 %v688
        %700 = vmatprep.subr.mxu0 %v687
        %701 = vmatpush1.msra.mxu0 %v686
        %702 = vmatprep.subr.mxu0 %v685
        %703 = vmatpush1.msra.mxu0 %v684
        %704 = vmatprep.subr.mxu0 %v683
        %705 = vmatpush1.msra.mxu0 %v682
        %706 = vmatprep.subr.mxu0 %v681
        %707 = vmatpush1.msra.mxu0 %v680
        %708 = vmatprep.subr.mxu0 %v679
        %709 = vmatpush1.msra.mxu0 %v678
        %710 = vmatprep.subr.mxu0 %v677
        %711 = vmatpush1.msra.mxu0 %v676
        %712 = vmatprep.subr.mxu0 %v675
        %713 = vmatpush1.msra.mxu0 %v674
        %714 = vmatprep.subr.mxu0 %v673
        %715 = vmatpush1.msra.mxu0 %v672
        %716 = vmatprep.subr.mxu0 %v671
        %717 = vmatpush1.msra.mxu0 %v670
        %718 = vmatprep.subr.mxu0 %v669
        %719 = vmatpush1.msra.mxu0 %v668
        %720 = vmatprep.subr.mxu0 %v667
        %721 = vmatpush1.msra.mxu0 %v666
        %722 = vmatprep.subr.mxu0 %v665
        %723 = vmatpush1.msra.mxu0 %v664
        %724 = vmatprep.subr.mxu0 %v663
        %725 = vmatpush1.msra.mxu0 %v662
        %726 = vmatprep.subr.mxu0 0.0
        %727 = vmatpush2.msra.mxu0 0.0
        %728 = vmatprep.subr.mxu0 0.0
        %729 = vmatpush2.msra.mxu0 0.0
        %730 = vmatprep.subr.mxu0 0.0
        %731 = vmatpush2.msra.mxu0 0.0
        %732 = vmatprep.subr.mxu0 0.0
        %733 = vmatpush2.msra.mxu0 0.0
        %734 = vmatprep.subr.mxu0 0.0
        %735 = vmatpush2.msra.mxu0 0.0
        %736 = vmatprep.subr.mxu0 0.0
        %737 = vmatpush2.msra.mxu0 0.0
        %738 = vmatprep.subr.mxu0 0.0
        %739 = vmatpush2.msra.mxu0 0.0
        %740 = vmatprep.subr.mxu0 0.0
        %741 = vmatpush2.msra.mxu0 0.0
        %742 = vmatprep.subr.mxu0 0.0
        %743 = vmatpush2.msra.mxu0 0.0
        %744 = vmatprep.subr.mxu0 0.0
        %745 = vmatpush2.msra.mxu0 0.0
        %746 = vmatprep.subr.mxu0 0.0
        %747 = vmatpush2.msra.mxu0 0.0
        %748 = vmatprep.subr.mxu0 0.0
        %749 = vmatpush2.msra.mxu0 0.0
        %750 = vmatprep.subr.mxu0 0.0
        %751 = vmatpush2.msra.mxu0 0.0
        %752 = vmatprep.subr.mxu0 0.0
        %753 = vmatpush2.msra.mxu0 0.0
        %754 = vmatprep.subr.mxu0 0.0
        %755 = vmatpush2.msra.mxu0 0.0
        %756 = vmatprep.subr.mxu0 0.0
        %757 = vmatpush2.msra.mxu0 0.0
        %758 = vmatprep.mubr.f32.mxu0 0.0
        %759 = vmatmul.mubr.f32.gmra.mxu0 %v629
        %v760 = vpop.f32.mrf.mxu0
        %v761 = vadd.f32 0.0, %v760
        %v762 = vpop.f32.mrf.mxu0
        %v763 = vadd.f32 0.0, %v762
        %764 = vdwg.mxu0
        %765 = vmatprep.subr.mxu0 %v661
        %766 = vmatpush1.msra.mxu0 %v660
        %767 = vmatprep.subr.mxu0 %v659
        %768 = vmatpush1.msra.mxu0 %v658
        %769 = vmatprep.subr.mxu0 %v657
        %770 = vmatpush1.msra.mxu0 %v656
        %771 = vmatprep.subr.mxu0 %v655
        %772 = vmatpush1.msra.mxu0 %v654
        %773 = vmatprep.subr.mxu0 %v653
        %774 = vmatpush1.msra.mxu0 %v652
        %775 = vmatprep.subr.mxu0 %v651
        %776 = vmatpush1.msra.mxu0 %v650
        %777 = vmatprep.subr.mxu0 %v649
        %778 = vmatpush1.msra.mxu0 %v648
        %779 = vmatprep.subr.mxu0 %v647
        %780 = vmatpush1.msra.mxu0 %v646
        %781 = vmatprep.subr.mxu0 %v645
        %782 = vmatpush1.msra.mxu0 %v644
        %783 = vmatprep.subr.mxu0 %v643
        %784 = vmatpush1.msra.mxu0 %v642
        %785 = vmatprep.subr.mxu0 %v641
        %786 = vmatpush1.msra.mxu0 %v640
        %787 = vmatprep.subr.mxu0 %v639
        %788 = vmatpush1.msra.mxu0 %v638
        %789 = vmatprep.subr.mxu0 %v637
        %790 = vmatpush1.msra.mxu0 %v636
        %791 = vmatprep.subr.mxu0 %v635
        %792 = vmatpush1.msra.mxu0 %v634
        %793 = vmatprep.subr.mxu0 %v633
        %794 = vmatpush1.msra.mxu0 %v632
        %795 = vmatprep.subr.mxu0 %v631
        %796 = vmatpush1.msra.mxu0 %v630
        %797 = vmatprep.subr.mxu0 0.0
        %798 = vmatpush2.msra.mxu0 0.0
        %799 = vmatprep.subr.mxu0 0.0
        %800 = vmatpush2.msra.mxu0 0.0
        %801 = vmatprep.subr.mxu0 0.0
        %802 = vmatpush2.msra.mxu0 0.0
        %803 = vmatprep.subr.mxu0 0.0
        %804 = vmatpush2.msra.mxu0 0.0
        %805 = vmatprep.subr.mxu0 0.0
        %806 = vmatpush2.msra.mxu0 0.0
        %807 = vmatprep.subr.mxu0 0.0
        %808 = vmatpush2.msra.mxu0 0.0
        %809 = vmatprep.subr.mxu0 0.0
        %810 = vmatpush2.msra.mxu0 0.0
        %811 = vmatprep.subr.mxu0 0.0
        %812 = vmatpush2.msra.mxu0 0.0
        %813 = vmatprep.subr.mxu0 0.0
        %814 = vmatpush2.msra.mxu0 0.0
        %815 = vmatprep.subr.mxu0 0.0
        %816 = vmatpush2.msra.mxu0 0.0
        %817 = vmatprep.subr.mxu0 0.0
        %818 = vmatpush2.msra.mxu0 0.0
        %819 = vmatprep.subr.mxu0 0.0
        %820 = vmatpush2.msra.mxu0 0.0
        %821 = vmatprep.subr.mxu0 0.0
        %822 = vmatpush2.msra.mxu0 0.0
        %823 = vmatprep.subr.mxu0 0.0
        %824 = vmatpush2.msra.mxu0 0.0
        %825 = vmatprep.subr.mxu0 0.0
        %826 = vmatpush2.msra.mxu0 0.0
        %827 = vmatprep.subr.mxu0 0.0
        %828 = vmatpush2.msra.mxu0 0.0
        %829 = vmatprep.mubr.f32.mxu0 0.0
        %830 = vmatmul.mubr.f32.gmra.mxu0 %v525
        %v831 = vpop.f32.mrf.mxu0
        %v832 = vadd.f32 %v761, %v831
        %v833 = vpop.f32.mrf.mxu0
        %v834 = vadd.f32 %v763, %v833
        %835 = vdwg.mxu0
        %v836 = vld [vmem:[%s4] sm:$0x3]
        %v838 = vlaneseq
        %v839 = vshrl.u32 %v838, 7
        %v840 = vsub.s32 0, %v839
        %v841 = vrot.slane %v836, %v840
        %v842 = vlaneseq
        %v843 = vshrl.u32 %v842, 7
        %v844 = vsub.s32 1, %v843
        %v845 = vrot.slane %v836, %v844
        %v848 = vadd.f32 %v832, %v841
        %v849 = vadd.f32 %v834, %v845
        %v850 = vxor.u32 %v848, 2147483648
        %v851 = vxor.u32 %v849, 2147483648
        %v852 = vmul.f32 %v850, 1.442695
        %v853 = vpow.pop %v852
        %v854 = vmul.f32 %v851, 1.442695
        %v855 = vpow.pop %v854
        %v856 = vadd.f32 %v853, 1.0
        %v857 = vadd.f32 %v855, 1.0
        %v858 = vrcp.pop %v856
        %v859 = vmul.f32 1.0, %v858
        %v860 = vrcp.pop %v857
        %v861 = vmul.f32 1.0, %v860
        %v862 = vmul.f32 %v848, %v859
        %v863 = vmul.f32 %v849, %v861
        %v864 = vld [vmem:[%s356] sm:$0xff]
        %v865 = vld [vmem:[%s356 + $0x8] sm:$0xff]
        %v866 = vld [vmem:[%s356 + $0x10] sm:$0xff]
        %v867 = vld [vmem:[%s356 + $0x18] sm:$0xff]
        %v868 = vld [vmem:[%s356 + $0x20] sm:$0xff]
        %v869 = vld [vmem:[%s356 + $0x28] sm:$0xff]
        %v870 = vld [vmem:[%s356 + $0x30] sm:$0xff]
        %v871 = vld [vmem:[%s356 + $0x38] sm:$0xff]
        %v872 = vld [vmem:[%s356 + $0x40] sm:$0xff]
        %v873 = vld [vmem:[%s356 + $0x48] sm:$0xff]
        %v874 = vld [vmem:[%s356 + $0x50] sm:$0xff]
        %v875 = vld [vmem:[%s356 + $0x58] sm:$0xff]
        %v876 = vld [vmem:[%s356 + $0x60] sm:$0xff]
        %v877 = vld [vmem:[%s356 + $0x68] sm:$0xff]
        %v878 = vld [vmem:[%s356 + $0x70] sm:$0xff]
        %v879 = vld [vmem:[%s356 + $0x78] sm:$0xff]
        %v880 = vld [vmem:[%s356 + $0x80] sm:$0xff]
        %v881 = vld [vmem:[%s356 + $0x88] sm:$0xff]
        %v882 = vld [vmem:[%s356 + $0x90] sm:$0xff]
        %v883 = vld [vmem:[%s356 + $0x98] sm:$0xff]
        %v884 = vld [vmem:[%s356 + $0xa0] sm:$0xff]
        %v885 = vld [vmem:[%s356 + $0xa8] sm:$0xff]
        %v886 = vld [vmem:[%s356 + $0xb0] sm:$0xff]
        %v887 = vld [vmem:[%s356 + $0xb8] sm:$0xff]
        %v888 = vld [vmem:[%s356 + $0xc0] sm:$0xff]
        %v889 = vld [vmem:[%s356 + $0xc8] sm:$0xff]
        %v890 = vld [vmem:[%s356 + $0xd0] sm:$0xff]
        %v891 = vld [vmem:[%s356 + $0xd8] sm:$0xff]
        %v892 = vld [vmem:[%s356 + $0xe0] sm:$0xff]
        %v893 = vld [vmem:[%s356 + $0xe8] sm:$0xff]
        %v894 = vld [vmem:[%s356 + $0xf0] sm:$0xff]
        %v895 = vld [vmem:[%s356 + $0xf8] sm:$0xff]
        %v896 = vld [vmem:[%s408] sm:$0x1]
        %v898 = vlaneseq
        %v899 = vshrl.u32 %v898, 7
        %v900 = vsub.s32 0, %v899
        %v901 = vrot.slane %v896, %v900
        %903 = vmatprep.subr.mxu0 0.0
        %904 = vmatpush1.msra.mxu0 %v879
        %905 = vmatprep.subr.mxu0 0.0
        %906 = vmatpush1.msra.mxu0 %v878
        %907 = vmatprep.subr.mxu0 0.0
        %908 = vmatpush1.msra.mxu0 %v877
        %909 = vmatprep.subr.mxu0 0.0
        %910 = vmatpush1.msra.mxu0 %v876
        %911 = vmatprep.subr.mxu0 0.0
        %912 = vmatpush1.msra.mxu0 %v875
        %913 = vmatprep.subr.mxu0 0.0
        %914 = vmatpush1.msra.mxu0 %v874
        %915 = vmatprep.subr.mxu0 0.0
        %916 = vmatpush1.msra.mxu0 %v873
        %917 = vmatprep.subr.mxu0 0.0
        %918 = vmatpush1.msra.mxu0 %v872
        %919 = vmatprep.subr.mxu0 0.0
        %920 = vmatpush1.msra.mxu0 %v871
        %921 = vmatprep.subr.mxu0 0.0
        %922 = vmatpush1.msra.mxu0 %v870
        %923 = vmatprep.subr.mxu0 0.0
        %924 = vmatpush1.msra.mxu0 %v869
        %925 = vmatprep.subr.mxu0 0.0
        %926 = vmatpush1.msra.mxu0 %v868
        %927 = vmatprep.subr.mxu0 0.0
        %928 = vmatpush1.msra.mxu0 %v867
        %929 = vmatprep.subr.mxu0 0.0
        %930 = vmatpush1.msra.mxu0 %v866
        %931 = vmatprep.subr.mxu0 0.0
        %932 = vmatpush1.msra.mxu0 %v865
        %933 = vmatprep.subr.mxu0 0.0
        %934 = vmatpush1.msra.mxu0 %v864
        %935 = vmatprep.subr.mxu0 0.0
        %936 = vmatpush2.msra.mxu0 %v895
        %937 = vmatprep.subr.mxu0 0.0
        %938 = vmatpush2.msra.mxu0 %v894
        %939 = vmatprep.subr.mxu0 0.0
        %940 = vmatpush2.msra.mxu0 %v893
        %941 = vmatprep.subr.mxu0 0.0
        %942 = vmatpush2.msra.mxu0 %v892
        %943 = vmatprep.subr.mxu0 0.0
        %944 = vmatpush2.msra.mxu0 %v891
        %945 = vmatprep.subr.mxu0 0.0
        %946 = vmatpush2.msra.mxu0 %v890
        %947 = vmatprep.subr.mxu0 0.0
        %948 = vmatpush2.msra.mxu0 %v889
        %949 = vmatprep.subr.mxu0 0.0
        %950 = vmatpush2.msra.mxu0 %v888
        %951 = vmatprep.subr.mxu0 0.0
        %952 = vmatpush2.msra.mxu0 %v887
        %953 = vmatprep.subr.mxu0 0.0
        %954 = vmatpush2.msra.mxu0 %v886
        %955 = vmatprep.subr.mxu0 0.0
        %956 = vmatpush2.msra.mxu0 %v885
        %957 = vmatprep.subr.mxu0 0.0
        %958 = vmatpush2.msra.mxu0 %v884
        %959 = vmatprep.subr.mxu0 0.0
        %960 = vmatpush2.msra.mxu0 %v883
        %961 = vmatprep.subr.mxu0 0.0
        %962 = vmatpush2.msra.mxu0 %v882
        %963 = vmatprep.subr.mxu0 0.0
        %964 = vmatpush2.msra.mxu0 %v881
        %965 = vmatprep.subr.mxu0 0.0
        %966 = vmatpush2.msra.mxu0 %v880
        %967 = vmatprep.mubr.f32.mxu0 %v863
        %968 = vmatmul.mubr.f32.gmra.mxu0 %v862
        %v969 = vpop.f32.mrf.mxu0
        %v970 = vadd.f32 %v901, %v969
        %v971 = vpop.f32.mrf.mxu0
        %972 = vdwg.mxu0
        %973 = vst [vmem:[%s398] sm:$0xff] %v970
        %s974 = sand.u32 %s234, 1
        %s975 = scalar_lea.sflag [#allocation4], %s974
        %s976 = sand.u32 %s234, 1
        %s977 = smul.addr %s976, 8
        %s978 = scalar_lea.vmem [#allocation8], %s977
        // Predicated region
        $region65: #{tpu_custom_call.1} parent=51 // pred_check
          %p979 = pneg %p244
        $region66: #{tpu_custom_call.1} parent=51 // pred_check_branch
          %981 = sbr.rel (%p979) target = $region68
        $region67: #{tpu_custom_call.1} parent=51 // pred_region
          %s983 = ssub.s32 128, 128
          %984 = vsyncadd %s975, %s983
          %s985 = smul.addr %s29, 2
          %s986 = sadd.s32 %s28, %s985
          %s987 = smul.addr %s986, 128
          %s988 = scalar_lea.hbm %s8, %s987
          %s990 = sshll.u32 %s978, 4
          %s991 = int_to_ptr.vmem [resolvable:$true] %s990
          %993 = dma.vmem_to_hbm [thread:$0]  %s991, 128, %s988, %s975
        $region68: #{tpu_custom_call.1} parent=51 // pred_fallthru
          _
      $region52: #{tpu_custom_call.1} parent=5 // pred_fallthru
        _
      %p994 = scmp.le.s32.totalorder 2, %s19
      // Predicated region
      $region69: #{tpu_custom_call.1} parent=5 // pred_check
        %p995 = pneg %p994
      $region70: #{tpu_custom_call.1} parent=5 // pred_check_branch
        %997 = sbr.rel (%p995) target = $region72
      $region71: #{tpu_custom_call.1} parent=5 // pred_region
        %s998 = ssub.s32 %s19, 2
        // Predicated region
        $region73: #{tpu_custom_call.1} parent=71 // pred_check
          %p999 = pneg %p250
        $region74: #{tpu_custom_call.1} parent=71 // pred_check_branch
          %1001 = sbr.rel (%p999) target = $region76
        $region75: #{tpu_custom_call.1} parent=71 // pred_region
          %s1002 = sand.u32 %s235, 1
          %s1003 = scalar_lea.sflag [#allocation4], %s1002
          %s1004 = sand.u32 %s235, 1
          %s1005 = smul.addr %s1004, 8
          %s1006 = scalar_lea.vmem [#allocation8], %s1005
          %1007 = dma.done %s1003, 128
        $region76: #{tpu_custom_call.1} parent=71 // pred_fallthru
          _
      $region72: #{tpu_custom_call.1} parent=5 // pred_fallthru
        _
    $region6: #{tpu_custom_call.1} parent=1 // loop_footer
      %s23 = sadd.s32 1, %s19
    $region7: #{tpu_custom_call.1} parent=1 // loop_footer_branch
      %18 = sbr.rel target = $region3
    $region8: #{tpu_custom_call.1} parent=1 // loop_exit
      _
    %1008 = vsyncpa [#allocation3], 1
    %s1009 = scalar_lea.sflag [#allocation3], 1
    %1010 = vsyncpa %s1009, 1
    %1011 = vsyncpa [#allocation6], 1
    %1012 = vsyncpa [#allocation4], 1
    %s1013 = scalar_lea.sflag [#allocation4], 1
    %1014 = vsyncpa %s1013, 1

</llo_original>
